<compile_context>
chip_gen: v7x
topology: tpu7x:2x2x1
jax: 0.10.0
libtpu: 0.0.40
codegen_flags: <defaults>
</compile_context>

<pallas_src>
import functools

import jax
import jax.numpy as jnp
from jax.experimental import pallas as pl
from jax.experimental.pallas import tpu as pltpu

N_WORDS = 8
INPUT_SIZE = 16
HIDDEN_SIZE = 32
FIN = 3 * HIDDEN_SIZE + INPUT_SIZE + HIDDEN_SIZE   # HiddenGate linear in-features
F2 = 2 * HIDDEN_SIZE                               # SentenceStateGate in-features


def slstm_kernel(h_ref, c_ref, g_ref, x_ref, cg_ref,
                 w_ilu_ref, w_fgo_ref, w_fi_ref, b_ref,
                 hc_out_ref, gcg_out_ref):
    f32 = jnp.float32
    H = HIDDEN_SIZE
    D = INPUT_SIZE

    prev_h = h_ref[...]          # (N, H)
    prev_c = c_ref[...]          # (N, H)
    prev_g = g_ref[...]          # (1, H)
    cg_prev = cg_ref[...]        # (1, H)
    x = x_ref[...]               # (N, D)
    N = prev_h.shape[0]

    # ---- neighbor windows built in-kernel (zero padded at the boundaries) ----
    # Tiny (N, N) shift operators from 2-D iota; applied on the (idle) MXU.
    r = jax.lax.broadcasted_iota(jnp.int32, (N, N), 0)
    col = jax.lax.broadcasted_iota(jnp.int32, (N, N), 1)
    sd = (r == col + 1).astype(f32)            # out[j] = in[j-1], row 0 -> 0
    su = (col == r + 1).astype(f32)            # out[j] = in[j+1], row N-1 -> 0
    tri = (jnp.abs(r - col) <= 1).astype(f32)  # left + center + right in one pass

    h_left = jnp.dot(sd, prev_h, preferred_element_type=f32)
    h_right = jnp.dot(su, prev_h, preferred_element_type=f32)
    c_nbr = jnp.dot(tri, prev_c, preferred_element_type=f32)   # c_left + c + c_right

    # ---- fused weights / biases ----
    W = w_ilu_ref[...]           # (FIN, 3H) = [w_i | w_l | w_u] along columns
    b = b_ref[...]               # (1, 6H)  = [b_i b_l b_u | b_fi | b_fg b_go]
    b_ilu = b[:, 0:3 * H]
    b_fi = b[:, 3 * H:4 * H]
    b_fgo = b[:, 4 * H:6 * H]

    # ---- per-word hidden gates: one fused (·,FIN)x(FIN,3H) matmul split over
    #      the FIN row-blocks (avoids building a concatenated feat array) ----
    z = (jnp.dot(h_left, W[0:H], preferred_element_type=f32)
         + jnp.dot(prev_h, W[H:2 * H], preferred_element_type=f32)
         + jnp.dot(h_right, W[2 * H:3 * H], preferred_element_type=f32)
         + jnp.dot(x, W[3 * H:3 * H + D], preferred_element_type=f32)
         + jnp.dot(prev_g, W[3 * H + D:], preferred_element_type=f32)  # (1,3H) bcast
         + b_ilu)                                                      # (N, 3H)

    i_g = jax.nn.sigmoid(z[:, 0:H])
    l_g = jax.nn.sigmoid(z[:, H:2 * H])
    u_g = jnp.tanh(z[:, 2 * H:3 * H])
    o_g = l_g                     # reference bug reproduced: r = f = s = o = l

    # softmax over the 5 stacked gates [i, l, r, f, s] == [i, l, l, l, l]
    m = jnp.maximum(i_g, l_g)
    e_i = jnp.exp(i_g - m)
    e_l = jnp.exp(l_g - m)
    inv = 1.0 / (e_i + 4.0 * e_l)
    i_s = e_i * inv
    l_s = e_l * inv               # == r_s == f_s == s_s

    c_new = l_s * (c_nbr + cg_prev) + i_s * u_g          # factored shared gate
    h_new = o_g * jnp.tanh(c_new)

    # ---- sentence-state gates ----
    h_avg = jnp.mean(prev_h, axis=0, keepdims=True)      # (1, H)
    Wfgo = w_fgo_ref[...]                                # (2H, 2H) = [w_fg | w_go]
    zfgo = (jnp.dot(prev_g, Wfgo[0:H], preferred_element_type=f32)
            + jnp.dot(h_avg, Wfgo[H:2 * H], preferred_element_type=f32)
            + b_fgo)                                     # (1, 2H)
    g_f_g = jax.nn.sigmoid(zfgo[:, 0:H])
    g_o = jax.nn.sigmoid(zfgo[:, H:2 * H])

    Wfi = w_fi_ref[...]                                  # (2H, H)
    g_f_i = jax.nn.sigmoid(
        jnp.dot(prev_g, Wfi[0:H], preferred_element_type=f32)       # (1,H) bcast
        + jnp.dot(prev_h, Wfi[H:2 * H], preferred_element_type=f32)  # (N,H)
        + b_fi)

    # softmax over the (N+1) stacked gates [g_f_i_0 ... g_f_i_{N-1}, g_f_g]
    m2 = jnp.maximum(jnp.max(g_f_i, axis=0, keepdims=True), g_f_g)   # (1, H)
    e_fi = jnp.exp(g_f_i - m2)
    e_fg = jnp.exp(g_f_g - m2)
    inv2 = 1.0 / (jnp.sum(e_fi, axis=0, keepdims=True) + e_fg)
    cg_new = (e_fg * inv2) * cg_prev + jnp.sum((e_fi * inv2) * prev_c,
                                               axis=0, keepdims=True)
    g_new = g_o * jnp.tanh(cg_new)

    # ---- packed, lane-dense outputs: [h | c] and [g | c_g] ----
    hc_out_ref[:, 0:H] = h_new
    hc_out_ref[:, H:2 * H] = c_new
    gcg_out_ref[:, 0:H] = g_new
    gcg_out_ref[:, H:2 * H] = cg_new


@jax.jit
def slstm_cell(fused_params, prev_h, prev_c, prev_g, x, prev_c_g):
    """prev_h, prev_c: (N, H); prev_g, prev_c_g: (1, H); x: (N, D)."""
    N, H = prev_h.shape
    inputs = [prev_h, prev_c, prev_g, x, prev_c_g,
              fused_params['w_ilu'], fused_params['w_fgo'],
              fused_params['w_fi'], fused_params['b_all']]

    vmem = pl.BlockSpec(memory_space=pltpu.MemorySpace.VMEM)
    hc, gcg = pl.pallas_call(
        slstm_kernel,
        out_shape=(jax.ShapeDtypeStruct((N, 2 * H), jnp.float32),
                   jax.ShapeDtypeStruct((1, 2 * H), jnp.float32)),
        in_specs=[vmem] * len(inputs),
        out_specs=(vmem, vmem),
    )(*inputs)
    return hc[:, :H], hc[:, H:], gcg[:, :H], gcg[:, H:]


def fuse_params(p):
    """Pack per-gate weights/biases into the fused layout the kernel expects."""
    return {
        'w_ilu': jnp.concatenate([p['w_i'], p['w_l'], p['w_u']], axis=1),   # (FIN, 3H)
        'w_fgo': jnp.concatenate([p['w_fg'], p['w_go']], axis=1),           # (2H, 2H)
        'w_fi': p['w_fi'],                                                  # (2H, H)
        'b_all': jnp.concatenate([p['b_i'], p['b_l'], p['b_u'],
                                  p['b_fi'], p['b_fg'], p['b_go']], axis=1),  # (1, 6H)
    }


def slstm_ref(params, prev_h, prev_c, prev_g, x, prev_c_g):
    """Pure-JAX reference with identical semantics (for verification)."""
    N, H = prev_h.shape
    zrow = jnp.zeros((1, H), prev_h.dtype)
    h_left = jnp.concatenate([zrow, prev_h[:-1]], axis=0)
    h_right = jnp.concatenate([prev_h[1:], zrow], axis=0)
    c_left = jnp.concatenate([zrow, prev_c[:-1]], axis=0)
    c_right = jnp.concatenate([prev_c[1:], zrow], axis=0)
    g_b = jnp.broadcast_to(prev_g, (N, H))
    feat = jnp.concatenate([h_left, prev_h, h_right, x, g_b], axis=-1)

    i_g = jax.nn.sigmoid(feat @ params['w_i'] + params['b_i'])
    l_g = jax.nn.sigmoid(feat @ params['w_l'] + params['b_l'])
    u_g = jnp.tanh(feat @ params['w_u'] + params['b_u'])
    o_g = l_g
    stk = jnp.stack([i_g, l_g, l_g, l_g, l_g], axis=0)
    sm = jax.nn.softmax(stk, axis=0)
    i_s, l_s, r_s, f_s, s_s = [sm[k] for k in range(5)]
    c_new = l_s * c_left + f_s * prev_c + r_s * c_right + s_s * prev_c_g + i_s * u_g
    h_new = o_g * jnp.tanh(c_new)

    h_avg = jnp.mean(prev_h, axis=0, keepdims=True)
    fg_feat = jnp.concatenate([prev_g, h_avg], axis=-1)
    g_f_g = jax.nn.sigmoid(fg_feat @ params['w_fg'] + params['b_fg'])
    g_o = jax.nn.sigmoid(fg_feat @ params['w_go'] + params['b_go'])
    fi_feat = jnp.concatenate([g_b, prev_h], axis=-1)
    g_f_i = jax.nn.sigmoid(fi_feat @ params['w_fi'] + params['b_fi'])
    allg = jnp.concatenate([g_f_i, g_f_g], axis=0)
    sm2 = jax.nn.softmax(allg, axis=0)
    fi_s, fg_s = sm2[:N], sm2[N:]
    cg_new = fg_s * prev_c_g + jnp.sum(fi_s * prev_c, axis=0, keepdims=True)
    g_new = g_o * jnp.tanh(cg_new)
    return h_new, c_new, g_new, cg_new


def make_params(key):
    ks = jax.random.split(key, 12)
    s = 0.05
    p = {}
    # HiddenGate weights, stored as (in_features, out_features) = PyTorch W.T
    p['w_i'] = s * jax.random.normal(ks[0], (FIN, HIDDEN_SIZE), jnp.float32)
    p['w_l'] = s * jax.random.normal(ks[1], (FIN, HIDDEN_SIZE), jnp.float32)
    p['w_u'] = s * jax.random.normal(ks[2], (FIN, HIDDEN_SIZE), jnp.float32)
    p['b_i'] = s * jax.random.normal(ks[3], (1, HIDDEN_SIZE), jnp.float32)
    p['b_l'] = s * jax.random.normal(ks[4], (1, HIDDEN_SIZE), jnp.float32)
    p['b_u'] = s * jax.random.normal(ks[5], (1, HIDDEN_SIZE), jnp.float32)
    # SentenceStateGate weights
    p['w_fg'] = s * jax.random.normal(ks[6], (F2, HIDDEN_SIZE), jnp.float32)
    p['w_fi'] = s * jax.random.normal(ks[7], (F2, HIDDEN_SIZE), jnp.float32)
    p['w_go'] = s * jax.random.normal(ks[8], (F2, HIDDEN_SIZE), jnp.float32)
    p['b_fg'] = s * jax.random.normal(ks[9], (1, HIDDEN_SIZE), jnp.float32)
    p['b_fi'] = s * jax.random.normal(ks[10], (1, HIDDEN_SIZE), jnp.float32)
    p['b_go'] = s * jax.random.normal(ks[11], (1, HIDDEN_SIZE), jnp.float32)
    return p


if __name__ == "__main__":
    key = jax.random.PRNGKey(0)
    kp, kh, kc, kg, kx, kcg = jax.random.split(key, 6)
    params = make_params(kp)
    fused = fuse_params(params)   # one-time weight fusion (outside the hot path)

    prev_h = jax.random.normal(kh, (N_WORDS, HIDDEN_SIZE), jnp.float32)
    prev_c = jax.random.normal(kc, (N_WORDS, HIDDEN_SIZE), jnp.float32)
    prev_g = jax.random.normal(kg, (1, HIDDEN_SIZE), jnp.float32)
    x = jax.random.normal(kx, (N_WORDS, INPUT_SIZE), jnp.float32)
    prev_c_g = jax.random.normal(kcg, (1, HIDDEN_SIZE), jnp.float32)

    outs = jax.block_until_ready(
        slstm_cell(fused, prev_h, prev_c, prev_g, x, prev_c_g))
    refs = slstm_ref(params, prev_h, prev_c, prev_g, x, prev_c_g)

    for o, r in zip(outs, refs):
        assert o.shape == r.shape and o.dtype == r.dtype
        assert jnp.allclose(o, r, atol=1e-4, rtol=1e-4), (
            float(jnp.max(jnp.abs(o - r))))

    print("KERNEL_OK")
</pallas_src>

<mosaic_0001>
module attributes {stable_mosaic.version = 11 : i64} {
  func.func @slstm_kernel(%arg0: memref<8x32xf32, #tpu.memory_space<vmem>>, %arg1: memref<8x32xf32, #tpu.memory_space<vmem>>, %arg2: memref<1x32xf32, #tpu.memory_space<vmem>>, %arg3: memref<8x16xf32, #tpu.memory_space<vmem>>, %arg4: memref<1x32xf32, #tpu.memory_space<vmem>>, %arg5: memref<144x96xf32, #tpu.memory_space<vmem>>, %arg6: memref<64x64xf32, #tpu.memory_space<vmem>>, %arg7: memref<64x32xf32, #tpu.memory_space<vmem>>, %arg8: memref<1x192xf32, #tpu.memory_space<vmem>>, %arg9: memref<8x64xf32, #tpu.memory_space<vmem>>, %arg10: memref<1x64xf32, #tpu.memory_space<vmem>>) attributes {dimension_semantics = [], scalar_prefetch = 0 : i64, scratch_operands = 0 : i64, tpu.core_type = #tpu.core_type<tc>} {
    %c0 = arith.constant 0 : index
    %c0_0 = arith.constant 0 : index
    %0 = vector.load %arg0[%c0, %c0_0] : memref<8x32xf32, #tpu.memory_space<vmem>>, vector<8x32xf32>
    %c0_1 = arith.constant 0 : index
    %c0_2 = arith.constant 0 : index
    %1 = vector.load %arg1[%c0_1, %c0_2] : memref<8x32xf32, #tpu.memory_space<vmem>>, vector<8x32xf32>
    %c0_3 = arith.constant 0 : index
    %c0_4 = arith.constant 0 : index
    %2 = vector.load %arg2[%c0_3, %c0_4] : memref<1x32xf32, #tpu.memory_space<vmem>>, vector<1x32xf32>
    %c0_5 = arith.constant 0 : index
    %c0_6 = arith.constant 0 : index
    %3 = vector.load %arg4[%c0_5, %c0_6] : memref<1x32xf32, #tpu.memory_space<vmem>>, vector<1x32xf32>
    %c0_7 = arith.constant 0 : index
    %c0_8 = arith.constant 0 : index
    %4 = vector.load %arg3[%c0_7, %c0_8] : memref<8x16xf32, #tpu.memory_space<vmem>>, vector<8x16xf32>
    %5 = tpu.iota {dimensions = array<i32: 0>} : vector<8x8xi32>
    %6 = tpu.iota {dimensions = array<i32: 1>} : vector<8x8xi32>
    %c1_i32 = arith.constant 1 : i32
    %7 = vector.broadcast %c1_i32 : i32 to vector<8x8xi32>
    %8 = arith.addi %6, %7 : vector<8x8xi32>
    %9 = arith.cmpi eq, %5, %8 : vector<8x8xi32>
    %10 = arith.extui %9 : vector<8x8xi1> to vector<8x8xi32>
    %11 = arith.sitofp %10 : vector<8x8xi32> to vector<8x8xf32>
    %c1_i32_9 = arith.constant 1 : i32
    %12 = vector.broadcast %c1_i32_9 : i32 to vector<8x8xi32>
    %13 = arith.addi %5, %12 : vector<8x8xi32>
    %14 = arith.cmpi eq, %6, %13 : vector<8x8xi32>
    %15 = arith.extui %14 : vector<8x8xi1> to vector<8x8xi32>
    %16 = arith.sitofp %15 : vector<8x8xi32> to vector<8x8xf32>
    %17 = arith.subi %5, %6 : vector<8x8xi32>
    %18 = math.absi %17 : vector<8x8xi32>
    %c1_i32_10 = arith.constant 1 : i32
    %19 = vector.broadcast %c1_i32_10 : i32 to vector<8x8xi32>
    %20 = arith.cmpi sle, %18, %19 : vector<8x8xi32>
    %21 = arith.extui %20 : vector<8x8xi1> to vector<8x8xi32>
    %22 = arith.sitofp %21 : vector<8x8xi32> to vector<8x8xf32>
    %cst = arith.constant dense<0.000000e+00> : vector<8x32xf32>
    %23 = tpu.matmul %11, %0, %cst {dimension_numbers = #tpu.dot_dimension_numbers<[1], [0], [0], [1], [0, 0, 1, 1], [], []>} : vector<8x8xf32>, vector<8x32xf32>, vector<8x32xf32> -> vector<8x32xf32>
    %cst_11 = arith.constant dense<0.000000e+00> : vector<8x32xf32>
    %24 = tpu.matmul %16, %0, %cst_11 {dimension_numbers = #tpu.dot_dimension_numbers<[1], [0], [0], [1], [0, 0, 1, 1], [], []>} : vector<8x8xf32>, vector<8x32xf32>, vector<8x32xf32> -> vector<8x32xf32>
    %cst_12 = arith.constant dense<0.000000e+00> : vector<8x32xf32>
    %25 = tpu.matmul %22, %1, %cst_12 {dimension_numbers = #tpu.dot_dimension_numbers<[1], [0], [0], [1], [0, 0, 1, 1], [], []>} : vector<8x8xf32>, vector<8x32xf32>, vector<8x32xf32> -> vector<8x32xf32>
    %c0_13 = arith.constant 0 : index
    %c0_14 = arith.constant 0 : index
    %26 = vector.load %arg5[%c0_13, %c0_14] : memref<144x96xf32, #tpu.memory_space<vmem>>, vector<144x96xf32>
    %c0_15 = arith.constant 0 : index
    %c0_16 = arith.constant 0 : index
    %27 = vector.load %arg8[%c0_15, %c0_16] : memref<1x192xf32, #tpu.memory_space<vmem>>, vector<1x192xf32>
    %28 = vector.extract_strided_slice %27 {offsets = [0, 0], sizes = [1, 96], strides = [1, 1]} : vector<1x192xf32> to vector<1x96xf32>
    %29 = vector.extract_strided_slice %27 {offsets = [0, 96], sizes = [1, 32], strides = [1, 1]} : vector<1x192xf32> to vector<1x32xf32>
    %30 = vector.extract_strided_slice %27 {offsets = [0, 128], sizes = [1, 64], strides = [1, 1]} : vector<1x192xf32> to vector<1x64xf32>
    %31 = vector.extract_strided_slice %26 {offsets = [0, 0], sizes = [32, 96], strides = [1, 1]} : vector<144x96xf32> to vector<32x96xf32>
    %cst_17 = arith.constant dense<0.000000e+00> : vector<8x96xf32>
    %32 = tpu.matmul %23, %31, %cst_17 {dimension_numbers = #tpu.dot_dimension_numbers<[1], [0], [0], [1], [0, 0, 1, 1], [], []>} : vector<8x32xf32>, vector<32x96xf32>, vector<8x96xf32> -> vector<8x96xf32>
    %33 = vector.extract_strided_slice %26 {offsets = [32, 0], sizes = [32, 96], strides = [1, 1]} : vector<144x96xf32> to vector<32x96xf32>
    %cst_18 = arith.constant dense<0.000000e+00> : vector<8x96xf32>
    %34 = tpu.matmul %0, %33, %cst_18 {dimension_numbers = #tpu.dot_dimension_numbers<[1], [0], [0], [1], [0, 0, 1, 1], [], []>} : vector<8x32xf32>, vector<32x96xf32>, vector<8x96xf32> -> vector<8x96xf32>
    %35 = arith.addf %32, %34 : vector<8x96xf32>
    %36 = vector.extract_strided_slice %26 {offsets = [64, 0], sizes = [32, 96], strides = [1, 1]} : vector<144x96xf32> to vector<32x96xf32>
    %cst_19 = arith.constant dense<0.000000e+00> : vector<8x96xf32>
    %37 = tpu.matmul %24, %36, %cst_19 {dimension_numbers = #tpu.dot_dimension_numbers<[1], [0], [0], [1], [0, 0, 1, 1], [], []>} : vector<8x32xf32>, vector<32x96xf32>, vector<8x96xf32> -> vector<8x96xf32>
    %38 = arith.addf %35, %37 : vector<8x96xf32>
    %39 = vector.extract_strided_slice %26 {offsets = [96, 0], sizes = [16, 96], strides = [1, 1]} : vector<144x96xf32> to vector<16x96xf32>
    %cst_20 = arith.constant dense<0.000000e+00> : vector<8x96xf32>
    %40 = tpu.matmul %4, %39, %cst_20 {dimension_numbers = #tpu.dot_dimension_numbers<[1], [0], [0], [1], [0, 0, 1, 1], [], []>} : vector<8x16xf32>, vector<16x96xf32>, vector<8x96xf32> -> vector<8x96xf32>
    %41 = arith.addf %38, %40 : vector<8x96xf32>
    %42 = vector.extract_strided_slice %26 {offsets = [112, 0], sizes = [32, 96], strides = [1, 1]} : vector<144x96xf32> to vector<32x96xf32>
    %cst_21 = arith.constant dense<0.000000e+00> : vector<1x96xf32>
    %43 = tpu.matmul %2, %42, %cst_21 {dimension_numbers = #tpu.dot_dimension_numbers<[1], [0], [0], [1], [0, 0, 1, 1], [], []>} : vector<1x32xf32>, vector<32x96xf32>, vector<1x96xf32> -> vector<1x96xf32>
    %44 = vector.broadcast %43 : vector<1x96xf32> to vector<8x96xf32>
    %45 = arith.addf %41, %44 : vector<8x96xf32>
    %46 = vector.broadcast %28 : vector<1x96xf32> to vector<8x96xf32>
    %47 = arith.addf %45, %46 : vector<8x96xf32>
    %48 = vector.extract_strided_slice %47 {offsets = [0, 0], sizes = [8, 32], strides = [1, 1]} : vector<8x96xf32> to vector<8x32xf32>
    %49 = arith.negf %48 : vector<8x32xf32>
    %50 = math.exp %49 : vector<8x32xf32>
    %cst_22 = arith.constant 1.000000e+00 : f32
    %51 = vector.broadcast %cst_22 : f32 to vector<8x32xf32>
    %52 = arith.addf %51, %50 : vector<8x32xf32>
    %53 = arith.divf %51, %52 : vector<8x32xf32>
    %54 = vector.extract_strided_slice %47 {offsets = [0, 32], sizes = [8, 32], strides = [1, 1]} : vector<8x96xf32> to vector<8x32xf32>
    %55 = arith.negf %54 : vector<8x32xf32>
    %56 = math.exp %55 : vector<8x32xf32>
    %cst_23 = arith.constant 1.000000e+00 : f32
    %57 = vector.broadcast %cst_23 : f32 to vector<8x32xf32>
    %58 = arith.addf %57, %56 : vector<8x32xf32>
    %59 = arith.divf %57, %58 : vector<8x32xf32>
    %60 = vector.extract_strided_slice %47 {offsets = [0, 64], sizes = [8, 32], strides = [1, 1]} : vector<8x96xf32> to vector<8x32xf32>
    %61 = math.tanh %60 : vector<8x32xf32>
    %62 = arith.maximumf %53, %59 : vector<8x32xf32>
    %63 = arith.subf %53, %62 : vector<8x32xf32>
    %64 = math.exp %63 : vector<8x32xf32>
    %65 = arith.subf %59, %62 : vector<8x32xf32>
    %66 = math.exp %65 : vector<8x32xf32>
    %cst_24 = arith.constant 4.000000e+00 : f32
    %67 = vector.broadcast %cst_24 : f32 to vector<8x32xf32>
    %68 = arith.mulf %67, %66 : vector<8x32xf32>
    %69 = arith.addf %64, %68 : vector<8x32xf32>
    %cst_25 = arith.constant 1.000000e+00 : f32
    %70 = vector.broadcast %cst_25 : f32 to vector<8x32xf32>
    %71 = arith.divf %70, %69 : vector<8x32xf32>
    %72 = arith.mulf %64, %71 : vector<8x32xf32>
    %73 = arith.mulf %66, %71 : vector<8x32xf32>
    %74 = vector.broadcast %3 : vector<1x32xf32> to vector<8x32xf32>
    %75 = arith.addf %25, %74 : vector<8x32xf32>
    %76 = arith.mulf %73, %75 : vector<8x32xf32>
    %77 = arith.mulf %72, %61 : vector<8x32xf32>
    %78 = arith.addf %76, %77 : vector<8x32xf32>
    %79 = math.tanh %78 : vector<8x32xf32>
    %80 = arith.mulf %59, %79 : vector<8x32xf32>
    %cst_26 = arith.constant dense<0.000000e+00> : vector<32xf32>
    %81 = vector.multi_reduction <add>, %0, %cst_26 [0] : vector<8x32xf32> to vector<32xf32>
    %82 = vector.shape_cast %81 : vector<32xf32> to vector<1x32xf32>
    %cst_27 = arith.constant 8.000000e+00 : f32
    %83 = vector.broadcast %cst_27 : f32 to vector<1x32xf32>
    %84 = arith.divf %82, %83 : vector<1x32xf32>
    %c0_28 = arith.constant 0 : index
    %c0_29 = arith.constant 0 : index
    %85 = vector.load %arg6[%c0_28, %c0_29] : memref<64x64xf32, #tpu.memory_space<vmem>>, vector<64x64xf32>
    %86 = vector.extract_strided_slice %85 {offsets = [0, 0], sizes = [32, 64], strides = [1, 1]} : vector<64x64xf32> to vector<32x64xf32>
    %cst_30 = arith.constant dense<0.000000e+00> : vector<1x64xf32>
    %87 = tpu.matmul %2, %86, %cst_30 {dimension_numbers = #tpu.dot_dimension_numbers<[1], [0], [0], [1], [0, 0, 1, 1], [], []>} : vector<1x32xf32>, vector<32x64xf32>, vector<1x64xf32> -> vector<1x64xf32>
    %88 = vector.extract_strided_slice %85 {offsets = [32, 0], sizes = [32, 64], strides = [1, 1]} : vector<64x64xf32> to vector<32x64xf32>
    %cst_31 = arith.constant dense<0.000000e+00> : vector<1x64xf32>
    %89 = tpu.matmul %84, %88, %cst_31 {dimension_numbers = #tpu.dot_dimension_numbers<[1], [0], [0], [1], [0, 0, 1, 1], [], []>} : vector<1x32xf32>, vector<32x64xf32>, vector<1x64xf32> -> vector<1x64xf32>
    %90 = arith.addf %87, %89 : vector<1x64xf32>
    %91 = arith.addf %90, %30 : vector<1x64xf32>
    %92 = vector.extract_strided_slice %91 {offsets = [0, 0], sizes = [1, 32], strides = [1, 1]} : vector<1x64xf32> to vector<1x32xf32>
    %93 = arith.negf %92 : vector<1x32xf32>
    %94 = math.exp %93 : vector<1x32xf32>
    %cst_32 = arith.constant 1.000000e+00 : f32
    %95 = vector.broadcast %cst_32 : f32 to vector<1x32xf32>
    %96 = arith.addf %95, %94 : vector<1x32xf32>
    %97 = arith.divf %95, %96 : vector<1x32xf32>
    %98 = vector.extract_strided_slice %91 {offsets = [0, 32], sizes = [1, 32], strides = [1, 1]} : vector<1x64xf32> to vector<1x32xf32>
    %99 = arith.negf %98 : vector<1x32xf32>
    %100 = math.exp %99 : vector<1x32xf32>
    %cst_33 = arith.constant 1.000000e+00 : f32
    %101 = vector.broadcast %cst_33 : f32 to vector<1x32xf32>
    %102 = arith.addf %101, %100 : vector<1x32xf32>
    %103 = arith.divf %101, %102 : vector<1x32xf32>
    %c0_34 = arith.constant 0 : index
    %c0_35 = arith.constant 0 : index
    %104 = vector.load %arg7[%c0_34, %c0_35] : memref<64x32xf32, #tpu.memory_space<vmem>>, vector<64x32xf32>
    %105 = vector.extract_strided_slice %104 {offsets = [0, 0], sizes = [32, 32], strides = [1, 1]} : vector<64x32xf32> to vector<32x32xf32>
    %cst_36 = arith.constant dense<0.000000e+00> : vector<1x32xf32>
    %106 = tpu.matmul %2, %105, %cst_36 {dimension_numbers = #tpu.dot_dimension_numbers<[1], [0], [0], [1], [0, 0, 1, 1], [], []>} : vector<1x32xf32>, vector<32x32xf32>, vector<1x32xf32> -> vector<1x32xf32>
    %107 = vector.extract_strided_slice %104 {offsets = [32, 0], sizes = [32, 32], strides = [1, 1]} : vector<64x32xf32> to vector<32x32xf32>
    %cst_37 = arith.constant dense<0.000000e+00> : vector<8x32xf32>
    %108 = tpu.matmul %0, %107, %cst_37 {dimension_numbers = #tpu.dot_dimension_numbers<[1], [0], [0], [1], [0, 0, 1, 1], [], []>} : vector<8x32xf32>, vector<32x32xf32>, vector<8x32xf32> -> vector<8x32xf32>
    %109 = vector.broadcast %106 : vector<1x32xf32> to vector<8x32xf32>
    %110 = arith.addf %109, %108 : vector<8x32xf32>
    %111 = vector.broadcast %29 : vector<1x32xf32> to vector<8x32xf32>
    %112 = arith.addf %110, %111 : vector<8x32xf32>
    %113 = arith.negf %112 : vector<8x32xf32>
    %114 = math.exp %113 : vector<8x32xf32>
    %cst_38 = arith.constant 1.000000e+00 : f32
    %115 = vector.broadcast %cst_38 : f32 to vector<8x32xf32>
    %116 = arith.addf %115, %114 : vector<8x32xf32>
    %117 = arith.divf %115, %116 : vector<8x32xf32>
    %cst_39 = arith.constant dense<0xFF800000> : vector<32xf32>
    %118 = vector.multi_reduction <maximumf>, %117, %cst_39 [0] : vector<8x32xf32> to vector<32xf32>
    %119 = vector.shape_cast %118 : vector<32xf32> to vector<1x32xf32>
    %120 = arith.maximumf %119, %97 : vector<1x32xf32>
    %121 = vector.broadcast %120 : vector<1x32xf32> to vector<8x32xf32>
    %122 = arith.subf %117, %121 : vector<8x32xf32>
    %123 = math.exp %122 : vector<8x32xf32>
    %124 = arith.subf %97, %120 : vector<1x32xf32>
    %125 = math.exp %124 : vector<1x32xf32>
    %cst_40 = arith.constant dense<0.000000e+00> : vector<32xf32>
    %126 = vector.multi_reduction <add>, %123, %cst_40 [0] : vector<8x32xf32> to vector<32xf32>
    %127 = vector.shape_cast %126 : vector<32xf32> to vector<1x32xf32>
    %128 = arith.addf %127, %125 : vector<1x32xf32>
    %cst_41 = arith.constant 1.000000e+00 : f32
    %129 = vector.broadcast %cst_41 : f32 to vector<1x32xf32>
    %130 = arith.divf %129, %128 : vector<1x32xf32>
    %131 = arith.mulf %125, %130 : vector<1x32xf32>
    %132 = arith.mulf %131, %3 : vector<1x32xf32>
    %133 = vector.broadcast %130 : vector<1x32xf32> to vector<8x32xf32>
    %134 = arith.mulf %123, %133 : vector<8x32xf32>
    %135 = arith.mulf %134, %1 : vector<8x32xf32>
    %cst_42 = arith.constant dense<0.000000e+00> : vector<32xf32>
    %136 = vector.multi_reduction <add>, %135, %cst_42 [0] : vector<8x32xf32> to vector<32xf32>
    %137 = vector.shape_cast %136 : vector<32xf32> to vector<1x32xf32>
    %138 = arith.addf %132, %137 : vector<1x32xf32>
    %139 = math.tanh %138 : vector<1x32xf32>
    %140 = arith.mulf %103, %139 : vector<1x32xf32>
    %c0_43 = arith.constant 0 : index
    %c0_44 = arith.constant 0 : index
    %141 = vector.load %arg9[%c0_43, %c0_44] : memref<8x64xf32, #tpu.memory_space<vmem>>, vector<8x32xf32>
    tpu.vector_store %arg9[%c0_43, %c0_44], %80 {strides = array<i32>} : memref<8x64xf32, #tpu.memory_space<vmem>>, vector<8x32xf32>,
    %c0_45 = arith.constant 0 : index
    %c32 = arith.constant 32 : index
    %142 = vector.load %arg9[%c0_45, %c32] : memref<8x64xf32, #tpu.memory_space<vmem>>, vector<8x32xf32>
    tpu.vector_store %arg9[%c0_45, %c32], %78 {strides = array<i32>} : memref<8x64xf32, #tpu.memory_space<vmem>>, vector<8x32xf32>,
    %c0_46 = arith.constant 0 : index
    %c0_47 = arith.constant 0 : index
    %143 = vector.load %arg10[%c0_46, %c0_47] : memref<1x64xf32, #tpu.memory_space<vmem>>, vector<1x32xf32>
    tpu.vector_store %arg10[%c0_46, %c0_47], %140 {strides = array<i32>} : memref<1x64xf32, #tpu.memory_space<vmem>>, vector<1x32xf32>,
    %c0_48 = arith.constant 0 : index
    %c32_49 = arith.constant 32 : index
    %144 = vector.load %arg10[%c0_48, %c32_49] : memref<1x64xf32, #tpu.memory_space<vmem>>, vector<1x32xf32>
    tpu.vector_store %arg10[%c0_48, %c32_49], %138 {strides = array<i32>} : memref<1x64xf32, #tpu.memory_space<vmem>>, vector<1x32xf32>,
    return
  }
}

</mosaic_0001>

<llo_original>
// kernel: slstm_cell.1
$region0: #{slstm_cell.1}
  #allocation0 [shape = 'u32[]', space=smem, size = 0x4, offset = 0x4, fixed_abs, tag = 'smem constant byte address 0x4 - core index']
  #allocation1 [shape = 'u32[144,128]{1,0:T(1,128)}', space=vmem, size = 0x12000, scoped, tag = 'internal scratch']
  %s0 = inlined_call_operand.vmem [shape: f32[8,32], index: 0, kind: input, shape index: {}]
  %s1 = inlined_call_operand.vmem [shape: f32[8,32], index: 1, kind: input, shape index: {}]
  %s2 = inlined_call_operand.vmem [shape: f32[1,32], index: 2, kind: input, shape index: {}]
  %s3 = inlined_call_operand.vmem [shape: f32[8,16], index: 3, kind: input, shape index: {}]
  %s4 = inlined_call_operand.vmem [shape: f32[1,32], index: 4, kind: input, shape index: {}]
  %s5 = inlined_call_operand.hbm [shape: f32[144,96], index: 5, kind: input, shape index: {}]
  %s6 = inlined_call_operand.vmem [shape: f32[64,64], index: 6, kind: input, shape index: {}]
  %s7 = inlined_call_operand.vmem [shape: f32[64,32], index: 7, kind: input, shape index: {}]
  %s8 = inlined_call_operand.vmem [shape: f32[1,192], index: 8, kind: input, shape index: {}]
  %s9 = inlined_call_operand.vmem [shape: f32[8,64], index: 9, kind: output, shape index: {0}]
  %s10 = inlined_call_operand.vmem [shape: f32[1,64], index: 10, kind: output, shape index: {1}]
  %11 = xla_tuple %s9, %s10
  %s12 = sld [smem:[#allocation0]]
  $region58: #{slstm_cell.1} parent=0
    _
  %s14 = ssub.s32 1, %s12
  %s15 = scalar_select 0, %s14, %s12
  $region1: #{slstm_cell.1} parent=0
    #allocation2 [shape = 'u8[73728]{0}', space=vmem, size = 0x12000, scoped, tag = 'input window, operand 5, single buffered']
    #allocation3 [shape = 's32[1]{0}', space=sflag, size = 0x4, scoped, tag = 'scoped memory for slstm_cell.1']
    %16 = vsyncpa [#allocation3], 0
    // Predicated region
    $region2: #{slstm_cell.1} parent=1 // pred_check
      _
    $region3: #{slstm_cell.1} parent=1 // pred_check_branch
      %18 = sbr.rel (0) target = $region5
    $region4: #{slstm_cell.1} parent=1 // pred_region
      _
    $region5: #{slstm_cell.1} parent=1 // pred_fallthru
      _
    // Predicated region
    $region6: #{slstm_cell.1} parent=1 // pred_check
      _
    $region7: #{slstm_cell.1} parent=1 // pred_check_branch
      %20 = sbr.rel (0) target = $region9
    $region8: #{slstm_cell.1} parent=1 // pred_region
      _
    $region9: #{slstm_cell.1} parent=1 // pred_fallthru
      _
    // Predicated region
    $region10: #{slstm_cell.1} parent=1 // pred_check
      _
    $region11: #{slstm_cell.1} parent=1 // pred_check_branch
      %22 = sbr.rel (0) target = $region13
    $region12: #{slstm_cell.1} parent=1 // pred_region
      _
    $region13: #{slstm_cell.1} parent=1 // pred_fallthru
      _
    // Predicated region
    $region14: #{slstm_cell.1} parent=1 // pred_check
      _
    $region15: #{slstm_cell.1} parent=1 // pred_check_branch
      %24 = sbr.rel (0) target = $region17
    $region16: #{slstm_cell.1} parent=1 // pred_region
      _
    $region17: #{slstm_cell.1} parent=1 // pred_fallthru
      _
    // Predicated region
    $region18: #{slstm_cell.1} parent=1 // pred_check
      _
    $region19: #{slstm_cell.1} parent=1 // pred_check_branch
      %26 = sbr.rel (0) target = $region21
    $region20: #{slstm_cell.1} parent=1 // pred_region
      _
    $region21: #{slstm_cell.1} parent=1 // pred_fallthru
      _
    // Predicated region
    $region22: #{slstm_cell.1} parent=1 // pred_check
      _
    $region23: #{slstm_cell.1} parent=1 // pred_check_branch
      %28 = sbr.rel (0) target = $region25
    $region24: #{slstm_cell.1} parent=1 // pred_region
      %s30 = ssub.s32 2304, 2304
      %31 = vsyncadd [#allocation3], %s30
      %s32 = sshll.u32 [#allocation2], 4
      %s33 = int_to_ptr.vmem [resolvable:$true] %s32
      %38 = dma.hbm_to_vmem [thread:$0]  %s5, 2304, %s33, [#allocation3], 128, 128, 8
    $region25: #{slstm_cell.1} parent=1 // pred_fallthru
      _
    // Predicated region
    $region26: #{slstm_cell.1} parent=1 // pred_check
      _
    $region27: #{slstm_cell.1} parent=1 // pred_check_branch
      %40 = sbr.rel (0) target = $region29
    $region28: #{slstm_cell.1} parent=1 // pred_region
      _
    $region29: #{slstm_cell.1} parent=1 // pred_fallthru
      _
    // Predicated region
    $region30: #{slstm_cell.1} parent=1 // pred_check
      _
    $region31: #{slstm_cell.1} parent=1 // pred_check_branch
      %42 = sbr.rel (0) target = $region33
    $region32: #{slstm_cell.1} parent=1 // pred_region
      _
    $region33: #{slstm_cell.1} parent=1 // pred_fallthru
      _
    // Predicated region
    $region34: #{slstm_cell.1} parent=1 // pred_check
      _
    $region35: #{slstm_cell.1} parent=1 // pred_check_branch
      %44 = sbr.rel (0) target = $region37
    $region36: #{slstm_cell.1} parent=1 // pred_region
      _
    $region37: #{slstm_cell.1} parent=1 // pred_fallthru
      _
    // Predicated region
    $region38: #{slstm_cell.1} parent=1 // pred_check
      _
    $region39: #{slstm_cell.1} parent=1 // pred_check_branch
      %46 = sbr.rel (0) target = $region41
    $region40: #{slstm_cell.1} parent=1 // pred_region
      %47 = dma.done [#allocation3], 2304
    $region41: #{slstm_cell.1} parent=1 // pred_fallthru
      _
    %v48 = vld [vmem:[%s0] sm:$0xff]
    %v49 = vld [vmem:[%s1] sm:$0xff]
    %v50 = vld [vmem:[%s2] sm:$0x1]
    %v51 = vld [vmem:[%s4] sm:$0x1]
    %v52 = vld [vmem:[%s3] sm:$0xff]
    %v53 = vlaneseq
    %v54 = vshrl.u32 %v53, 7
    %v55 = vlaneseq
    %v56 = vand.u32 %v55, 127
    %v57 = vadd.s32 %v56, 1
    %vm58 = vcmp.eq.s32.totalorder %v54, %v57
    %v59 = vsel %vm58, 1, 0
    %v60 = vcvt.s32.f32 %v59
    %v61 = vadd.s32 %v54, 1
    %vm62 = vcmp.eq.s32.totalorder %v56, %v61
    %v63 = vsel %vm62, 1, 0
    %v64 = vcvt.s32.f32 %v63
    %v65 = vsub.s32 %v54, %v56
    %vm66 = vcmp.lt.s32.totalorder %v65, 0
    %v67 = vsub.s32 0, %v65
    %v68 = vsel %vm66, %v67, %v65
    %vm69 = vcmp.le.s32.totalorder %v68, 1
    %v70 = vsel %vm69, 1, 0
    %v71 = vcvt.s32.f32 %v70
    %vm72 = vcmask 64512
    %v74 = vsel %vm72, %v60, 0
    %76 = vmatprep.subr.mxu0 0.0
    %77 = vmatpush1.msra.mxu0 %v48
    %78 = vmatprep.subr.mxu0 0.0
    %79 = vmatpush1.msra.mxu0 0.0
    %80 = vmatprep.subr.mxu0 0.0
    %81 = vmatpush1.msra.mxu0 0.0
    %82 = vmatprep.subr.mxu0 0.0
    %83 = vmatpush1.msra.mxu0 0.0
    %84 = vmatprep.subr.mxu0 0.0
    %85 = vmatpush1.msra.mxu0 0.0
    %86 = vmatprep.subr.mxu0 0.0
    %87 = vmatpush1.msra.mxu0 0.0
    %88 = vmatprep.subr.mxu0 0.0
    %89 = vmatpush1.msra.mxu0 0.0
    %90 = vmatprep.subr.mxu0 0.0
    %91 = vmatpush1.msra.mxu0 0.0
    %92 = vmatprep.subr.mxu0 0.0
    %93 = vmatpush1.msra.mxu0 0.0
    %94 = vmatprep.subr.mxu0 0.0
    %95 = vmatpush1.msra.mxu0 0.0
    %96 = vmatprep.subr.mxu0 0.0
    %97 = vmatpush1.msra.mxu0 0.0
    %98 = vmatprep.subr.mxu0 0.0
    %99 = vmatpush1.msra.mxu0 0.0
    %100 = vmatprep.subr.mxu0 0.0
    %101 = vmatpush1.msra.mxu0 0.0
    %102 = vmatprep.subr.mxu0 0.0
    %103 = vmatpush1.msra.mxu0 0.0
    %104 = vmatprep.subr.mxu0 0.0
    %105 = vmatpush1.msra.mxu0 0.0
    %106 = vmatprep.subr.mxu0 0.0
    %107 = vmatpush1.msra.mxu0 0.0
    %108 = vmatprep.subr.mxu0 0.0
    %109 = vmatpush1.msra.mxu0 0.0
    %110 = vmatprep.subr.mxu0 0.0
    %111 = vmatpush1.msra.mxu0 0.0
    %112 = vmatprep.subr.mxu0 0.0
    %113 = vmatpush1.msra.mxu0 0.0
    %114 = vmatprep.subr.mxu0 0.0
    %115 = vmatpush1.msra.mxu0 0.0
    %116 = vmatprep.subr.mxu0 0.0
    %117 = vmatpush1.msra.mxu0 0.0
    %118 = vmatprep.subr.mxu0 0.0
    %119 = vmatpush1.msra.mxu0 0.0
    %120 = vmatprep.subr.mxu0 0.0
    %121 = vmatpush1.msra.mxu0 0.0
    %122 = vmatprep.subr.mxu0 0.0
    %123 = vmatpush1.msra.mxu0 0.0
    %124 = vmatprep.subr.mxu0 0.0
    %125 = vmatpush1.msra.mxu0 0.0
    %126 = vmatprep.subr.mxu0 0.0
    %127 = vmatpush1.msra.mxu0 0.0
    %128 = vmatprep.subr.mxu0 0.0
    %129 = vmatpush1.msra.mxu0 0.0
    %130 = vmatprep.subr.mxu0 0.0
    %131 = vmatpush1.msra.mxu0 0.0
    %132 = vmatprep.subr.mxu0 0.0
    %133 = vmatpush1.msra.mxu0 0.0
    %134 = vmatprep.subr.mxu0 0.0
    %135 = vmatpush1.msra.mxu0 0.0
    %136 = vmatprep.subr.mxu0 0.0
    %137 = vmatpush1.msra.mxu0 0.0
    %138 = vmatprep.subr.mxu0 0.0
    %139 = vmatpush1.msra.mxu0 0.0
    %140 = vmatprep.mubr.f32.mxu0 0.0
    %141 = vmatmul.mubr.f32.gmra.mrb[0].mxu0 %v74
    %v142 = vpop.f32.mrb[0].mxu0
    %v143 = vadd.f32 0.0, %v142
    %v144 = vpop.f32.mrb[0].mxu0
    %145 = vdwg.mxu0
    %v147 = vsel %vm72, %v64, 0
    %149 = vmatprep.subr.mxu0 0.0
    %150 = vmatpush1.msra.mxu0 %v48
    %151 = vmatprep.subr.mxu0 0.0
    %152 = vmatpush1.msra.mxu0 0.0
    %153 = vmatprep.subr.mxu0 0.0
    %154 = vmatpush1.msra.mxu0 0.0
    %155 = vmatprep.subr.mxu0 0.0
    %156 = vmatpush1.msra.mxu0 0.0
    %157 = vmatprep.subr.mxu0 0.0
    %158 = vmatpush1.msra.mxu0 0.0
    %159 = vmatprep.subr.mxu0 0.0
    %160 = vmatpush1.msra.mxu0 0.0
    %161 = vmatprep.subr.mxu0 0.0
    %162 = vmatpush1.msra.mxu0 0.0
    %163 = vmatprep.subr.mxu0 0.0
    %164 = vmatpush1.msra.mxu0 0.0
    %165 = vmatprep.subr.mxu0 0.0
    %166 = vmatpush1.msra.mxu0 0.0
    %167 = vmatprep.subr.mxu0 0.0
    %168 = vmatpush1.msra.mxu0 0.0
    %169 = vmatprep.subr.mxu0 0.0
    %170 = vmatpush1.msra.mxu0 0.0
    %171 = vmatprep.subr.mxu0 0.0
    %172 = vmatpush1.msra.mxu0 0.0
    %173 = vmatprep.subr.mxu0 0.0
    %174 = vmatpush1.msra.mxu0 0.0
    %175 = vmatprep.subr.mxu0 0.0
    %176 = vmatpush1.msra.mxu0 0.0
    %177 = vmatprep.subr.mxu0 0.0
    %178 = vmatpush1.msra.mxu0 0.0
    %179 = vmatprep.subr.mxu0 0.0
    %180 = vmatpush1.msra.mxu0 0.0
    %181 = vmatprep.subr.mxu0 0.0
    %182 = vmatpush1.msra.mxu0 0.0
    %183 = vmatprep.subr.mxu0 0.0
    %184 = vmatpush1.msra.mxu0 0.0
    %185 = vmatprep.subr.mxu0 0.0
    %186 = vmatpush1.msra.mxu0 0.0
    %187 = vmatprep.subr.mxu0 0.0
    %188 = vmatpush1.msra.mxu0 0.0
    %189 = vmatprep.subr.mxu0 0.0
    %190 = vmatpush1.msra.mxu0 0.0
    %191 = vmatprep.subr.mxu0 0.0
    %192 = vmatpush1.msra.mxu0 0.0
    %193 = vmatprep.subr.mxu0 0.0
    %194 = vmatpush1.msra.mxu0 0.0
    %195 = vmatprep.subr.mxu0 0.0
    %196 = vmatpush1.msra.mxu0 0.0
    %197 = vmatprep.subr.mxu0 0.0
    %198 = vmatpush1.msra.mxu0 0.0
    %199 = vmatprep.subr.mxu0 0.0
    %200 = vmatpush1.msra.mxu0 0.0
    %201 = vmatprep.subr.mxu0 0.0
    %202 = vmatpush1.msra.mxu0 0.0
    %203 = vmatprep.subr.mxu0 0.0
    %204 = vmatpush1.msra.mxu0 0.0
    %205 = vmatprep.subr.mxu0 0.0
    %206 = vmatpush1.msra.mxu0 0.0
    %207 = vmatprep.subr.mxu0 0.0
    %208 = vmatpush1.msra.mxu0 0.0
    %209 = vmatprep.subr.mxu0 0.0
    %210 = vmatpush1.msra.mxu0 0.0
    %211 = vmatprep.subr.mxu0 0.0
    %212 = vmatpush1.msra.mxu0 0.0
    %213 = vmatprep.mubr.f32.mxu0 0.0
    %214 = vmatmul.mubr.f32.gmra.mrb[0].mxu0 %v147
    %v215 = vpop.f32.mrb[0].mxu0
    %v216 = vadd.f32 0.0, %v215
    %v217 = vpop.f32.mrb[0].mxu0
    %218 = vdwg.mxu0
    %v219 = vld [vmem:[#allocation2] sm:$0xff]
    %v220 = vld [vmem:[#allocation2 + $0x8] sm:$0xff]
    %v221 = vld [vmem:[#allocation2 + $0x10] sm:$0xff]
    %v222 = vld [vmem:[#allocation2 + $0x18] sm:$0xff]
    %v223 = vld [vmem:[#allocation2 + $0x20] sm:$0xff]
    %v224 = vld [vmem:[#allocation2 + $0x28] sm:$0xff]
    %v225 = vld [vmem:[#allocation2 + $0x30] sm:$0xff]
    %v226 = vld [vmem:[#allocation2 + $0x38] sm:$0xff]
    %v227 = vld [vmem:[#allocation2 + $0x40] sm:$0xff]
    %v228 = vld [vmem:[#allocation2 + $0x48] sm:$0xff]
    %v229 = vld [vmem:[#allocation2 + $0x50] sm:$0xff]
    %v230 = vld [vmem:[#allocation2 + $0x58] sm:$0xff]
    %v231 = vld [vmem:[#allocation2 + $0x60] sm:$0xff]
    %v232 = vld [vmem:[#allocation2 + $0x68] sm:$0xff]
    %v233 = vld [vmem:[#allocation2 + $0x70] sm:$0xff]
    %v234 = vld [vmem:[#allocation2 + $0x78] sm:$0xff]
    %v235 = vld [vmem:[#allocation2 + $0x80] sm:$0xff]
    %v236 = vld [vmem:[#allocation2 + $0x88] sm:$0xff]
    %v237 = vld [vmem:[%s8] sm:$0x3]
    %vm238 = vcmask 261120
    %v240 = vsel %vm238, %v48, 0
    %242 = vmatprep.subr.mxu0 0.0
    %243 = vmatpush1.msra.mxu0 %v223
    %244 = vmatprep.subr.mxu0 0.0
    %245 = vmatpush1.msra.mxu0 %v224
    %246 = vmatprep.subr.mxu0 0.0
    %247 = vmatpush1.msra.mxu0 %v225
    %248 = vmatprep.subr.mxu0 0.0
    %249 = vmatpush1.msra.mxu0 %v226
    %250 = vmatprep.subr.mxu0 0.0
    %251 = vmatpush1.msra.mxu0 0.0
    %252 = vmatprep.subr.mxu0 0.0
    %253 = vmatpush1.msra.mxu0 0.0
    %254 = vmatprep.subr.mxu0 0.0
    %255 = vmatpush1.msra.mxu0 0.0
    %256 = vmatprep.subr.mxu0 0.0
    %257 = vmatpush1.msra.mxu0 0.0
    %258 = vmatprep.subr.mxu0 0.0
    %259 = vmatpush1.msra.mxu0 0.0
    %260 = vmatprep.subr.mxu0 0.0
    %261 = vmatpush1.msra.mxu0 0.0
    %262 = vmatprep.subr.mxu0 0.0
    %263 = vmatpush1.msra.mxu0 0.0
    %264 = vmatprep.subr.mxu0 0.0
    %265 = vmatpush1.msra.mxu0 0.0
    %266 = vmatprep.subr.mxu0 0.0
    %267 = vmatpush1.msra.mxu0 0.0
    %268 = vmatprep.subr.mxu0 0.0
    %269 = vmatpush1.msra.mxu0 0.0
    %270 = vmatprep.subr.mxu0 0.0
    %271 = vmatpush1.msra.mxu0 0.0
    %272 = vmatprep.subr.mxu0 0.0
    %273 = vmatpush1.msra.mxu0 0.0
    %274 = vmatprep.subr.mxu0 0.0
    %275 = vmatpush1.msra.mxu0 0.0
    %276 = vmatprep.subr.mxu0 0.0
    %277 = vmatpush1.msra.mxu0 0.0
    %278 = vmatprep.subr.mxu0 0.0
    %279 = vmatpush1.msra.mxu0 0.0
    %280 = vmatprep.subr.mxu0 0.0
    %281 = vmatpush1.msra.mxu0 0.0
    %282 = vmatprep.subr.mxu0 0.0
    %283 = vmatpush1.msra.mxu0 0.0
    %284 = vmatprep.subr.mxu0 0.0
    %285 = vmatpush1.msra.mxu0 0.0
    %286 = vmatprep.subr.mxu0 0.0
    %287 = vmatpush1.msra.mxu0 0.0
    %288 = vmatprep.subr.mxu0 0.0
    %289 = vmatpush1.msra.mxu0 0.0
    %290 = vmatprep.subr.mxu0 0.0
    %291 = vmatpush1.msra.mxu0 0.0
    %292 = vmatprep.subr.mxu0 0.0
    %293 = vmatpush1.msra.mxu0 0.0
    %294 = vmatprep.subr.mxu0 0.0
    %295 = vmatpush1.msra.mxu0 0.0
    %296 = vmatprep.subr.mxu0 0.0
    %297 = vmatpush1.msra.mxu0 0.0
    %298 = vmatprep.subr.mxu0 0.0
    %299 = vmatpush1.msra.mxu0 0.0
    %300 = vmatprep.subr.mxu0 0.0
    %301 = vmatpush1.msra.mxu0 0.0
    %302 = vmatprep.subr.mxu0 0.0
    %303 = vmatpush1.msra.mxu0 0.0
    %304 = vmatprep.subr.mxu0 0.0
    %305 = vmatpush1.msra.mxu0 0.0
    %306 = vmatprep.mubr.f32.mxu0 0.0
    %307 = vmatmul.mubr.f32.gmra.mrb[0].mxu0 %v240
    %v308 = vpop.f32.mrb[0].mxu0
    %v309 = vadd.f32 0.0, %v308
    %v310 = vpop.f32.mrb[0].mxu0
    %311 = vdwg.mxu0
    %v313 = vsel %vm238, %v143, 0
    %315 = vmatprep.subr.mxu0 0.0
    %316 = vmatpush1.msra.mxu0 %v219
    %317 = vmatprep.subr.mxu0 0.0
    %318 = vmatpush1.msra.mxu0 %v220
    %319 = vmatprep.subr.mxu0 0.0
    %320 = vmatpush1.msra.mxu0 %v221
    %321 = vmatprep.subr.mxu0 0.0
    %322 = vmatpush1.msra.mxu0 %v222
    %323 = vmatprep.subr.mxu0 0.0
    %324 = vmatpush1.msra.mxu0 0.0
    %325 = vmatprep.subr.mxu0 0.0
    %326 = vmatpush1.msra.mxu0 0.0
    %327 = vmatprep.subr.mxu0 0.0
    %328 = vmatpush1.msra.mxu0 0.0
    %329 = vmatprep.subr.mxu0 0.0
    %330 = vmatpush1.msra.mxu0 0.0
    %331 = vmatprep.subr.mxu0 0.0
    %332 = vmatpush1.msra.mxu0 0.0
    %333 = vmatprep.subr.mxu0 0.0
    %334 = vmatpush1.msra.mxu0 0.0
    %335 = vmatprep.subr.mxu0 0.0
    %336 = vmatpush1.msra.mxu0 0.0
    %337 = vmatprep.subr.mxu0 0.0
    %338 = vmatpush1.msra.mxu0 0.0
    %339 = vmatprep.subr.mxu0 0.0
    %340 = vmatpush1.msra.mxu0 0.0
    %341 = vmatprep.subr.mxu0 0.0
    %342 = vmatpush1.msra.mxu0 0.0
    %343 = vmatprep.subr.mxu0 0.0
    %344 = vmatpush1.msra.mxu0 0.0
    %345 = vmatprep.subr.mxu0 0.0
    %346 = vmatpush1.msra.mxu0 0.0
    %347 = vmatprep.subr.mxu0 0.0
    %348 = vmatpush1.msra.mxu0 0.0
    %349 = vmatprep.subr.mxu0 0.0
    %350 = vmatpush1.msra.mxu0 0.0
    %351 = vmatprep.subr.mxu0 0.0
    %352 = vmatpush1.msra.mxu0 0.0
    %353 = vmatprep.subr.mxu0 0.0
    %354 = vmatpush1.msra.mxu0 0.0
    %355 = vmatprep.subr.mxu0 0.0
    %356 = vmatpush1.msra.mxu0 0.0
    %357 = vmatprep.subr.mxu0 0.0
    %358 = vmatpush1.msra.mxu0 0.0
    %359 = vmatprep.subr.mxu0 0.0
    %360 = vmatpush1.msra.mxu0 0.0
    %361 = vmatprep.subr.mxu0 0.0
    %362 = vmatpush1.msra.mxu0 0.0
    %363 = vmatprep.subr.mxu0 0.0
    %364 = vmatpush1.msra.mxu0 0.0
    %365 = vmatprep.subr.mxu0 0.0
    %366 = vmatpush1.msra.mxu0 0.0
    %367 = vmatprep.subr.mxu0 0.0
    %368 = vmatpush1.msra.mxu0 0.0
    %369 = vmatprep.subr.mxu0 0.0
    %370 = vmatpush1.msra.mxu0 0.0
    %371 = vmatprep.subr.mxu0 0.0
    %372 = vmatpush1.msra.mxu0 0.0
    %373 = vmatprep.subr.mxu0 0.0
    %374 = vmatpush1.msra.mxu0 0.0
    %375 = vmatprep.subr.mxu0 0.0
    %376 = vmatpush1.msra.mxu0 0.0
    %377 = vmatprep.subr.mxu0 0.0
    %378 = vmatpush1.msra.mxu0 0.0
    %379 = vmatprep.mubr.f32.mxu0 0.0
    %380 = vmatmul.mubr.f32.gmra.mrb[0].mxu0 %v313
    %v381 = vpop.f32.mrb[0].mxu0
    %v382 = vadd.f32 %v309, %v381
    %v383 = vpop.f32.mrb[0].mxu0
    %384 = vdwg.mxu0
    %v386 = vsel %vm238, %v216, 0
    %388 = vmatprep.subr.mxu0 0.0
    %389 = vmatpush1.msra.mxu0 %v227
    %390 = vmatprep.subr.mxu0 0.0
    %391 = vmatpush1.msra.mxu0 %v228
    %392 = vmatprep.subr.mxu0 0.0
    %393 = vmatpush1.msra.mxu0 %v229
    %394 = vmatprep.subr.mxu0 0.0
    %395 = vmatpush1.msra.mxu0 %v230
    %396 = vmatprep.subr.mxu0 0.0
    %397 = vmatpush1.msra.mxu0 0.0
    %398 = vmatprep.subr.mxu0 0.0
    %399 = vmatpush1.msra.mxu0 0.0
    %400 = vmatprep.subr.mxu0 0.0
    %401 = vmatpush1.msra.mxu0 0.0
    %402 = vmatprep.subr.mxu0 0.0
    %403 = vmatpush1.msra.mxu0 0.0
    %404 = vmatprep.subr.mxu0 0.0
    %405 = vmatpush1.msra.mxu0 0.0
    %406 = vmatprep.subr.mxu0 0.0
    %407 = vmatpush1.msra.mxu0 0.0
    %408 = vmatprep.subr.mxu0 0.0
    %409 = vmatpush1.msra.mxu0 0.0
    %410 = vmatprep.subr.mxu0 0.0
    %411 = vmatpush1.msra.mxu0 0.0
    %412 = vmatprep.subr.mxu0 0.0
    %413 = vmatpush1.msra.mxu0 0.0
    %414 = vmatprep.subr.mxu0 0.0
    %415 = vmatpush1.msra.mxu0 0.0
    %416 = vmatprep.subr.mxu0 0.0
    %417 = vmatpush1.msra.mxu0 0.0
    %418 = vmatprep.subr.mxu0 0.0
    %419 = vmatpush1.msra.mxu0 0.0
    %420 = vmatprep.subr.mxu0 0.0
    %421 = vmatpush1.msra.mxu0 0.0
    %422 = vmatprep.subr.mxu0 0.0
    %423 = vmatpush1.msra.mxu0 0.0
    %424 = vmatprep.subr.mxu0 0.0
    %425 = vmatpush1.msra.mxu0 0.0
    %426 = vmatprep.subr.mxu0 0.0
    %427 = vmatpush1.msra.mxu0 0.0
    %428 = vmatprep.subr.mxu0 0.0
    %429 = vmatpush1.msra.mxu0 0.0
    %430 = vmatprep.subr.mxu0 0.0
    %431 = vmatpush1.msra.mxu0 0.0
    %432 = vmatprep.subr.mxu0 0.0
    %433 = vmatpush1.msra.mxu0 0.0
    %434 = vmatprep.subr.mxu0 0.0
    %435 = vmatpush1.msra.mxu0 0.0
    %436 = vmatprep.subr.mxu0 0.0
    %437 = vmatpush1.msra.mxu0 0.0
    %438 = vmatprep.subr.mxu0 0.0
    %439 = vmatpush1.msra.mxu0 0.0
    %440 = vmatprep.subr.mxu0 0.0
    %441 = vmatpush1.msra.mxu0 0.0
    %442 = vmatprep.subr.mxu0 0.0
    %443 = vmatpush1.msra.mxu0 0.0
    %444 = vmatprep.subr.mxu0 0.0
    %445 = vmatpush1.msra.mxu0 0.0
    %446 = vmatprep.subr.mxu0 0.0
    %447 = vmatpush1.msra.mxu0 0.0
    %448 = vmatprep.subr.mxu0 0.0
    %449 = vmatpush1.msra.mxu0 0.0
    %450 = vmatprep.subr.mxu0 0.0
    %451 = vmatpush1.msra.mxu0 0.0
    %452 = vmatprep.mubr.f32.mxu0 0.0
    %453 = vmatmul.mubr.f32.gmra.mrb[0].mxu0 %v386
    %v454 = vpop.f32.mrb[0].mxu0
    %v455 = vadd.f32 0.0, %v454
    %v456 = vpop.f32.mrb[0].mxu0
    %457 = vdwg.mxu0
    %v458 = vadd.f32 %v382, %v455
    %vm459 = vcmask 130048
    %v461 = vsel %vm459, %v52, 0
    %463 = vmatprep.subr.mxu0 0.0
    %464 = vmatpush1.msra.mxu0 %v231
    %465 = vmatprep.subr.mxu0 0.0
    %466 = vmatpush1.msra.mxu0 %v232
    %467 = vmatprep.subr.mxu0 0.0
    %468 = vmatpush1.msra.mxu0 0.0
    %469 = vmatprep.subr.mxu0 0.0
    %470 = vmatpush1.msra.mxu0 0.0
    %471 = vmatprep.subr.mxu0 0.0
    %472 = vmatpush1.msra.mxu0 0.0
    %473 = vmatprep.subr.mxu0 0.0
    %474 = vmatpush1.msra.mxu0 0.0
    %475 = vmatprep.subr.mxu0 0.0
    %476 = vmatpush1.msra.mxu0 0.0
    %477 = vmatprep.subr.mxu0 0.0
    %478 = vmatpush1.msra.mxu0 0.0
    %479 = vmatprep.subr.mxu0 0.0
    %480 = vmatpush1.msra.mxu0 0.0
    %481 = vmatprep.subr.mxu0 0.0
    %482 = vmatpush1.msra.mxu0 0.0
    %483 = vmatprep.subr.mxu0 0.0
    %484 = vmatpush1.msra.mxu0 0.0
    %485 = vmatprep.subr.mxu0 0.0
    %486 = vmatpush1.msra.mxu0 0.0
    %487 = vmatprep.subr.mxu0 0.0
    %488 = vmatpush1.msra.mxu0 0.0
    %489 = vmatprep.subr.mxu0 0.0
    %490 = vmatpush1.msra.mxu0 0.0
    %491 = vmatprep.subr.mxu0 0.0
    %492 = vmatpush1.msra.mxu0 0.0
    %493 = vmatprep.subr.mxu0 0.0
    %494 = vmatpush1.msra.mxu0 0.0
    %495 = vmatprep.subr.mxu0 0.0
    %496 = vmatpush1.msra.mxu0 0.0
    %497 = vmatprep.subr.mxu0 0.0
    %498 = vmatpush1.msra.mxu0 0.0
    %499 = vmatprep.subr.mxu0 0.0
    %500 = vmatpush1.msra.mxu0 0.0
    %501 = vmatprep.subr.mxu0 0.0
    %502 = vmatpush1.msra.mxu0 0.0
    %503 = vmatprep.subr.mxu0 0.0
    %504 = vmatpush1.msra.mxu0 0.0
    %505 = vmatprep.subr.mxu0 0.0
    %506 = vmatpush1.msra.mxu0 0.0
    %507 = vmatprep.subr.mxu0 0.0
    %508 = vmatpush1.msra.mxu0 0.0
    %509 = vmatprep.subr.mxu0 0.0
    %510 = vmatpush1.msra.mxu0 0.0
    %511 = vmatprep.subr.mxu0 0.0
    %512 = vmatpush1.msra.mxu0 0.0
    %513 = vmatprep.subr.mxu0 0.0
    %514 = vmatpush1.msra.mxu0 0.0
    %515 = vmatprep.subr.mxu0 0.0
    %516 = vmatpush1.msra.mxu0 0.0
    %517 = vmatprep.subr.mxu0 0.0
    %518 = vmatpush1.msra.mxu0 0.0
    %519 = vmatprep.subr.mxu0 0.0
    %520 = vmatpush1.msra.mxu0 0.0
    %521 = vmatprep.subr.mxu0 0.0
    %522 = vmatpush1.msra.mxu0 0.0
    %523 = vmatprep.subr.mxu0 0.0
    %524 = vmatpush1.msra.mxu0 0.0
    %525 = vmatprep.subr.mxu0 0.0
    %526 = vmatpush1.msra.mxu0 0.0
    %527 = vmatprep.mubr.f32.mxu0 0.0
    %528 = vmatmul.mubr.f32.gmra.mrb[0].mxu0 %v461
    %v529 = vpop.f32.mrb[0].mxu0
    %v530 = vadd.f32 0.0, %v529
    %v531 = vpop.f32.mrb[0].mxu0
    %532 = vdwg.mxu0
    %v533 = vadd.f32 %v458, %v530
    %v535 = vsel %vm238, %v50, 0
    %537 = vmatprep.subr.mxu0 0.0
    %538 = vmatpush1.msra.mxu0 %v233
    %539 = vmatprep.subr.mxu0 0.0
    %540 = vmatpush1.msra.mxu0 %v234
    %541 = vmatprep.subr.mxu0 0.0
    %542 = vmatpush1.msra.mxu0 %v235
    %543 = vmatprep.subr.mxu0 0.0
    %544 = vmatpush1.msra.mxu0 %v236
    %545 = vmatprep.subr.mxu0 0.0
    %546 = vmatpush1.msra.mxu0 0.0
    %547 = vmatprep.subr.mxu0 0.0
    %548 = vmatpush1.msra.mxu0 0.0
    %549 = vmatprep.subr.mxu0 0.0
    %550 = vmatpush1.msra.mxu0 0.0
    %551 = vmatprep.subr.mxu0 0.0
    %552 = vmatpush1.msra.mxu0 0.0
    %553 = vmatprep.subr.mxu0 0.0
    %554 = vmatpush1.msra.mxu0 0.0
    %555 = vmatprep.subr.mxu0 0.0
    %556 = vmatpush1.msra.mxu0 0.0
    %557 = vmatprep.subr.mxu0 0.0
    %558 = vmatpush1.msra.mxu0 0.0
    %559 = vmatprep.subr.mxu0 0.0
    %560 = vmatpush1.msra.mxu0 0.0
    %561 = vmatprep.subr.mxu0 0.0
    %562 = vmatpush1.msra.mxu0 0.0
    %563 = vmatprep.subr.mxu0 0.0
    %564 = vmatpush1.msra.mxu0 0.0
    %565 = vmatprep.subr.mxu0 0.0
    %566 = vmatpush1.msra.mxu0 0.0
    %567 = vmatprep.subr.mxu0 0.0
    %568 = vmatpush1.msra.mxu0 0.0
    %569 = vmatprep.subr.mxu0 0.0
    %570 = vmatpush1.msra.mxu0 0.0
    %571 = vmatprep.subr.mxu0 0.0
    %572 = vmatpush1.msra.mxu0 0.0
    %573 = vmatprep.subr.mxu0 0.0
    %574 = vmatpush1.msra.mxu0 0.0
    %575 = vmatprep.subr.mxu0 0.0
    %576 = vmatpush1.msra.mxu0 0.0
    %577 = vmatprep.subr.mxu0 0.0
    %578 = vmatpush1.msra.mxu0 0.0
    %579 = vmatprep.subr.mxu0 0.0
    %580 = vmatpush1.msra.mxu0 0.0
    %581 = vmatprep.subr.mxu0 0.0
    %582 = vmatpush1.msra.mxu0 0.0
    %583 = vmatprep.subr.mxu0 0.0
    %584 = vmatpush1.msra.mxu0 0.0
    %585 = vmatprep.subr.mxu0 0.0
    %586 = vmatpush1.msra.mxu0 0.0
    %587 = vmatprep.subr.mxu0 0.0
    %588 = vmatpush1.msra.mxu0 0.0
    %589 = vmatprep.subr.mxu0 0.0
    %590 = vmatpush1.msra.mxu0 0.0
    %591 = vmatprep.subr.mxu0 0.0
    %592 = vmatpush1.msra.mxu0 0.0
    %593 = vmatprep.subr.mxu0 0.0
    %594 = vmatpush1.msra.mxu0 0.0
    %595 = vmatprep.subr.mxu0 0.0
    %596 = vmatpush1.msra.mxu0 0.0
    %597 = vmatprep.subr.mxu0 0.0
    %598 = vmatpush1.msra.mxu0 0.0
    %599 = vmatprep.subr.mxu0 0.0
    %600 = vmatpush1.msra.mxu0 0.0
    %601 = vmatprep.mubr.f32.mxu0 0.0
    %602 = vmatmul.mubr.f32.gmra.mrb[0].mxu0 %v535
    %v603 = vpop.f32.mrb[0].mxu0
    %v604 = vadd.f32 0.0, %v603
    %v605 = vpop.f32.mrb[0].mxu0
    %606 = vdwg.mxu0
    %v607 = vlaneseq
    %v608 = vshrl.u32 %v607, 7
    %v609 = vsub.s32 0, %v608
    %v610 = vrot.slane %v604, %v609
    %v611 = vadd.f32 %v533, %v610
    %v613 = vlaneseq
    %v614 = vshrl.u32 %v613, 7
    %v615 = vsub.s32 0, %v614
    %v616 = vrot.slane %v237, %v615
    %v618 = vadd.f32 %v611, %v616
    %v619 = vxor.u32 %v618, 2147483648
    %v620 = vmul.f32 %v619, 1.442695
    %v621 = vpow.pop %v620
    %v622 = vadd.f32 %v621, 1.0
    %v623 = vrcp.pop %v622
    %v624 = vmul.f32 1.0, %v623
    %v625 = vtanh.pop %v618
    %627 = vrot.lane.b32.xlu0 %v624, 96
    %v628 = vpop.permute.xlu0 %627
    %v630 = vmax.f32 %v624, %v628
    %v631 = vsub.f32 %v624, %v630
    %v632 = vmul.f32 %v631, 1.442695
    %v633 = vpow.pop %v632
    %635 = vrot.lane.b32.xlu0 %v630, 32
    %v636 = vpop.permute.xlu0 %635
    %v638 = vsub.f32 %v624, %v636
    %v639 = vmul.f32 %v638, 1.442695
    %v640 = vpow.pop %v639
    %v641 = vmul.f32 %v640, 4.0
    %643 = vrot.lane.b32.xlu0 %v641, 96
    %v644 = vpop.permute.xlu0 %643
    %v646 = vadd.f32 %v633, %v644
    %v647 = vrcp.pop %v646
    %v648 = vmul.f32 1.0, %v647
    %v649 = vmul.f32 %v633, %v648
    %651 = vrot.lane.b32.xlu0 %v648, 32
    %v652 = vpop.permute.xlu0 %651
    %v654 = vmul.f32 %v640, %v652
    %v656 = vlaneseq
    %v657 = vshrl.u32 %v656, 7
    %v658 = vsub.s32 0, %v657
    %v659 = vrot.slane %v51, %v658
    %v662 = vsel %vm72, %v71, 0
    %664 = vmatprep.subr.mxu0 0.0
    %665 = vmatpush1.msra.mxu0 %v49
    %666 = vmatprep.subr.mxu0 0.0
    %667 = vmatpush1.msra.mxu0 0.0
    %668 = vmatprep.subr.mxu0 0.0
    %669 = vmatpush1.msra.mxu0 0.0
    %670 = vmatprep.subr.mxu0 0.0
    %671 = vmatpush1.msra.mxu0 0.0
    %672 = vmatprep.subr.mxu0 0.0
    %673 = vmatpush1.msra.mxu0 0.0
    %674 = vmatprep.subr.mxu0 0.0
    %675 = vmatpush1.msra.mxu0 0.0
    %676 = vmatprep.subr.mxu0 0.0
    %677 = vmatpush1.msra.mxu0 0.0
    %678 = vmatprep.subr.mxu0 0.0
    %679 = vmatpush1.msra.mxu0 0.0
    %680 = vmatprep.subr.mxu0 0.0
    %681 = vmatpush1.msra.mxu0 0.0
    %682 = vmatprep.subr.mxu0 0.0
    %683 = vmatpush1.msra.mxu0 0.0
    %684 = vmatprep.subr.mxu0 0.0
    %685 = vmatpush1.msra.mxu0 0.0
    %686 = vmatprep.subr.mxu0 0.0
    %687 = vmatpush1.msra.mxu0 0.0
    %688 = vmatprep.subr.mxu0 0.0
    %689 = vmatpush1.msra.mxu0 0.0
    %690 = vmatprep.subr.mxu0 0.0
    %691 = vmatpush1.msra.mxu0 0.0
    %692 = vmatprep.subr.mxu0 0.0
    %693 = vmatpush1.msra.mxu0 0.0
    %694 = vmatprep.subr.mxu0 0.0
    %695 = vmatpush1.msra.mxu0 0.0
    %696 = vmatprep.subr.mxu0 0.0
    %697 = vmatpush1.msra.mxu0 0.0
    %698 = vmatprep.subr.mxu0 0.0
    %699 = vmatpush1.msra.mxu0 0.0
    %700 = vmatprep.subr.mxu0 0.0
    %701 = vmatpush1.msra.mxu0 0.0
    %702 = vmatprep.subr.mxu0 0.0
    %703 = vmatpush1.msra.mxu0 0.0
    %704 = vmatprep.subr.mxu0 0.0
    %705 = vmatpush1.msra.mxu0 0.0
    %706 = vmatprep.subr.mxu0 0.0
    %707 = vmatpush1.msra.mxu0 0.0
    %708 = vmatprep.subr.mxu0 0.0
    %709 = vmatpush1.msra.mxu0 0.0
    %710 = vmatprep.subr.mxu0 0.0
    %711 = vmatpush1.msra.mxu0 0.0
    %712 = vmatprep.subr.mxu0 0.0
    %713 = vmatpush1.msra.mxu0 0.0
    %714 = vmatprep.subr.mxu0 0.0
    %715 = vmatpush1.msra.mxu0 0.0
    %716 = vmatprep.subr.mxu0 0.0
    %717 = vmatpush1.msra.mxu0 0.0
    %718 = vmatprep.subr.mxu0 0.0
    %719 = vmatpush1.msra.mxu0 0.0
    %720 = vmatprep.subr.mxu0 0.0
    %721 = vmatpush1.msra.mxu0 0.0
    %722 = vmatprep.subr.mxu0 0.0
    %723 = vmatpush1.msra.mxu0 0.0
    %724 = vmatprep.subr.mxu0 0.0
    %725 = vmatpush1.msra.mxu0 0.0
    %726 = vmatprep.subr.mxu0 0.0
    %727 = vmatpush1.msra.mxu0 0.0
    %728 = vmatprep.mubr.f32.mxu0 0.0
    %729 = vmatmul.mubr.f32.gmra.mrb[0].mxu0 %v662
    %v730 = vpop.f32.mrb[0].mxu0
    %v731 = vadd.f32 %v659, %v730
    %v732 = vpop.f32.mrb[0].mxu0
    %733 = vdwg.mxu0
    %735 = vrot.lane.b32.xlu0 %v731, 32
    %v736 = vpop.permute.xlu0 %735
    %v738 = vmul.f32 %v654, %v736
    %740 = vrot.lane.b32.xlu0 %v625, 64
    %v741 = vpop.permute.xlu0 %740
    %v743 = vmul.f32 %v649, %v741
    %745 = vrot.lane.b32.xlu0 %v743, 32
    %v746 = vpop.permute.xlu0 %745
    %v748 = vadd.f32 %v738, %v746
    %v749 = vtanh.pop %v748
    %v750 = vmul.f32 %v624, %v749
    %v751 = vsel %vm238, %v48, 0.0
    %v752 = vrot.slane %v751, 4
    %v753 = vadd.f32 %v751, %v752
    %v754 = vrot.slane %v753, 2
    %v755 = vadd.f32 %v753, %v754
    %v756 = vrot.slane %v755, 1
    %v757 = vadd.f32 %v755, %v756
    %v758 = vrcp.pop 8.0
    %v759 = vmul.f32 %v757, %v758
    %v760 = vld [vmem:[%s6] sm:$0xff]
    %v761 = vld [vmem:[%s6 + $0x8] sm:$0xff]
    %v762 = vld [vmem:[%s6 + $0x10] sm:$0xff]
    %v763 = vld [vmem:[%s6 + $0x18] sm:$0xff]
    %v764 = vld [vmem:[%s6 + $0x20] sm:$0xff]
    %v765 = vld [vmem:[%s6 + $0x28] sm:$0xff]
    %v766 = vld [vmem:[%s6 + $0x30] sm:$0xff]
    %v767 = vld [vmem:[%s6 + $0x38] sm:$0xff]
    %v769 = vsel %vm238, %v759, 0
    %771 = vmatprep.subr.mxu0 0.0
    %772 = vmatpush1.msra.mxu0 %v764
    %773 = vmatprep.subr.mxu0 0.0
    %774 = vmatpush1.msra.mxu0 %v765
    %775 = vmatprep.subr.mxu0 0.0
    %776 = vmatpush1.msra.mxu0 %v766
    %777 = vmatprep.subr.mxu0 0.0
    %778 = vmatpush1.msra.mxu0 %v767
    %779 = vmatprep.subr.mxu0 0.0
    %780 = vmatpush1.msra.mxu0 0.0
    %781 = vmatprep.subr.mxu0 0.0
    %782 = vmatpush1.msra.mxu0 0.0
    %783 = vmatprep.subr.mxu0 0.0
    %784 = vmatpush1.msra.mxu0 0.0
    %785 = vmatprep.subr.mxu0 0.0
    %786 = vmatpush1.msra.mxu0 0.0
    %787 = vmatprep.subr.mxu0 0.0
    %788 = vmatpush1.msra.mxu0 0.0
    %789 = vmatprep.subr.mxu0 0.0
    %790 = vmatpush1.msra.mxu0 0.0
    %791 = vmatprep.subr.mxu0 0.0
    %792 = vmatpush1.msra.mxu0 0.0
    %793 = vmatprep.subr.mxu0 0.0
    %794 = vmatpush1.msra.mxu0 0.0
    %795 = vmatprep.subr.mxu0 0.0
    %796 = vmatpush1.msra.mxu0 0.0
    %797 = vmatprep.subr.mxu0 0.0
    %798 = vmatpush1.msra.mxu0 0.0
    %799 = vmatprep.subr.mxu0 0.0
    %800 = vmatpush1.msra.mxu0 0.0
    %801 = vmatprep.subr.mxu0 0.0
    %802 = vmatpush1.msra.mxu0 0.0
    %803 = vmatprep.subr.mxu0 0.0
    %804 = vmatpush1.msra.mxu0 0.0
    %805 = vmatprep.subr.mxu0 0.0
    %806 = vmatpush1.msra.mxu0 0.0
    %807 = vmatprep.subr.mxu0 0.0
    %808 = vmatpush1.msra.mxu0 0.0
    %809 = vmatprep.subr.mxu0 0.0
    %810 = vmatpush1.msra.mxu0 0.0
    %811 = vmatprep.subr.mxu0 0.0
    %812 = vmatpush1.msra.mxu0 0.0
    %813 = vmatprep.subr.mxu0 0.0
    %814 = vmatpush1.msra.mxu0 0.0
    %815 = vmatprep.subr.mxu0 0.0
    %816 = vmatpush1.msra.mxu0 0.0
    %817 = vmatprep.subr.mxu0 0.0
    %818 = vmatpush1.msra.mxu0 0.0
    %819 = vmatprep.subr.mxu0 0.0
    %820 = vmatpush1.msra.mxu0 0.0
    %821 = vmatprep.subr.mxu0 0.0
    %822 = vmatpush1.msra.mxu0 0.0
    %823 = vmatprep.subr.mxu0 0.0
    %824 = vmatpush1.msra.mxu0 0.0
    %825 = vmatprep.subr.mxu0 0.0
    %826 = vmatpush1.msra.mxu0 0.0
    %827 = vmatprep.subr.mxu0 0.0
    %828 = vmatpush1.msra.mxu0 0.0
    %829 = vmatprep.subr.mxu0 0.0
    %830 = vmatpush1.msra.mxu0 0.0
    %831 = vmatprep.subr.mxu0 0.0
    %832 = vmatpush1.msra.mxu0 0.0
    %833 = vmatprep.subr.mxu0 0.0
    %834 = vmatpush1.msra.mxu0 0.0
    %835 = vmatprep.mubr.f32.mxu0 0.0
    %836 = vmatmul.mubr.f32.gmra.mrb[0].mxu0 %v769
    %v837 = vpop.f32.mrb[0].mxu0
    %v838 = vadd.f32 0.0, %v837
    %v839 = vpop.f32.mrb[0].mxu0
    %840 = vdwg.mxu0
    %841 = vmatprep.subr.mxu0 0.0
    %842 = vmatpush1.msra.mxu0 %v760
    %843 = vmatprep.subr.mxu0 0.0
    %844 = vmatpush1.msra.mxu0 %v761
    %845 = vmatprep.subr.mxu0 0.0
    %846 = vmatpush1.msra.mxu0 %v762
    %847 = vmatprep.subr.mxu0 0.0
    %848 = vmatpush1.msra.mxu0 %v763
    %849 = vmatprep.subr.mxu0 0.0
    %850 = vmatpush1.msra.mxu0 0.0
    %851 = vmatprep.subr.mxu0 0.0
    %852 = vmatpush1.msra.mxu0 0.0
    %853 = vmatprep.subr.mxu0 0.0
    %854 = vmatpush1.msra.mxu0 0.0
    %855 = vmatprep.subr.mxu0 0.0
    %856 = vmatpush1.msra.mxu0 0.0
    %857 = vmatprep.subr.mxu0 0.0
    %858 = vmatpush1.msra.mxu0 0.0
    %859 = vmatprep.subr.mxu0 0.0
    %860 = vmatpush1.msra.mxu0 0.0
    %861 = vmatprep.subr.mxu0 0.0
    %862 = vmatpush1.msra.mxu0 0.0
    %863 = vmatprep.subr.mxu0 0.0
    %864 = vmatpush1.msra.mxu0 0.0
    %865 = vmatprep.subr.mxu0 0.0
    %866 = vmatpush1.msra.mxu0 0.0
    %867 = vmatprep.subr.mxu0 0.0
    %868 = vmatpush1.msra.mxu0 0.0
    %869 = vmatprep.subr.mxu0 0.0
    %870 = vmatpush1.msra.mxu0 0.0
    %871 = vmatprep.subr.mxu0 0.0
    %872 = vmatpush1.msra.mxu0 0.0
    %873 = vmatprep.subr.mxu0 0.0
    %874 = vmatpush1.msra.mxu0 0.0
    %875 = vmatprep.subr.mxu0 0.0
    %876 = vmatpush1.msra.mxu0 0.0
    %877 = vmatprep.subr.mxu0 0.0
    %878 = vmatpush1.msra.mxu0 0.0
    %879 = vmatprep.subr.mxu0 0.0
    %880 = vmatpush1.msra.mxu0 0.0
    %881 = vmatprep.subr.mxu0 0.0
    %882 = vmatpush1.msra.mxu0 0.0
    %883 = vmatprep.subr.mxu0 0.0
    %884 = vmatpush1.msra.mxu0 0.0
    %885 = vmatprep.subr.mxu0 0.0
    %886 = vmatpush1.msra.mxu0 0.0
    %887 = vmatprep.subr.mxu0 0.0
    %888 = vmatpush1.msra.mxu0 0.0
    %889 = vmatprep.subr.mxu0 0.0
    %890 = vmatpush1.msra.mxu0 0.0
    %891 = vmatprep.subr.mxu0 0.0
    %892 = vmatpush1.msra.mxu0 0.0
    %893 = vmatprep.subr.mxu0 0.0
    %894 = vmatpush1.msra.mxu0 0.0
    %895 = vmatprep.subr.mxu0 0.0
    %896 = vmatpush1.msra.mxu0 0.0
    %897 = vmatprep.subr.mxu0 0.0
    %898 = vmatpush1.msra.mxu0 0.0
    %899 = vmatprep.subr.mxu0 0.0
    %900 = vmatpush1.msra.mxu0 0.0
    %901 = vmatprep.subr.mxu0 0.0
    %902 = vmatpush1.msra.mxu0 0.0
    %903 = vmatprep.subr.mxu0 0.0
    %904 = vmatpush1.msra.mxu0 0.0
    %905 = vmatprep.mubr.f32.mxu0 0.0
    %906 = vmatmul.mubr.f32.gmra.mrb[0].mxu0 %v535
    %v907 = vpop.f32.mrb[0].mxu0
    %v908 = vadd.f32 %v838, %v907
    %v909 = vpop.f32.mrb[0].mxu0
    %910 = vdwg.mxu0
    %v911 = vlaneseq
    %v912 = vshrl.u32 %v911, 7
    %v913 = vsub.s32 1, %v912
    %v914 = vrot.slane %v237, %v913
    %v916 = vadd.f32 %v908, %v914
    %v917 = vxor.u32 %v916, 2147483648
    %v918 = vmul.f32 %v917, 1.442695
    %v919 = vpow.pop %v918
    %v920 = vadd.f32 %v919, 1.0
    %v921 = vrcp.pop %v920
    %v922 = vmul.f32 1.0, %v921
    %v923 = vld [vmem:[%s7] sm:$0xff]
    %v924 = vld [vmem:[%s7 + $0x8] sm:$0xff]
    %v925 = vld [vmem:[%s7 + $0x10] sm:$0xff]
    %v926 = vld [vmem:[%s7 + $0x18] sm:$0xff]
    %v927 = vld [vmem:[%s7 + $0x20] sm:$0xff]
    %v928 = vld [vmem:[%s7 + $0x28] sm:$0xff]
    %v929 = vld [vmem:[%s7 + $0x30] sm:$0xff]
    %v930 = vld [vmem:[%s7 + $0x38] sm:$0xff]
    %931 = vmatprep.subr.mxu0 0.0
    %932 = vmatpush1.msra.mxu0 %v923
    %933 = vmatprep.subr.mxu0 0.0
    %934 = vmatpush1.msra.mxu0 %v924
    %935 = vmatprep.subr.mxu0 0.0
    %936 = vmatpush1.msra.mxu0 %v925
    %937 = vmatprep.subr.mxu0 0.0
    %938 = vmatpush1.msra.mxu0 %v926
    %939 = vmatprep.subr.mxu0 0.0
    %940 = vmatpush1.msra.mxu0 0.0
    %941 = vmatprep.subr.mxu0 0.0
    %942 = vmatpush1.msra.mxu0 0.0
    %943 = vmatprep.subr.mxu0 0.0
    %944 = vmatpush1.msra.mxu0 0.0
    %945 = vmatprep.subr.mxu0 0.0
    %946 = vmatpush1.msra.mxu0 0.0
    %947 = vmatprep.subr.mxu0 0.0
    %948 = vmatpush1.msra.mxu0 0.0
    %949 = vmatprep.subr.mxu0 0.0
    %950 = vmatpush1.msra.mxu0 0.0
    %951 = vmatprep.subr.mxu0 0.0
    %952 = vmatpush1.msra.mxu0 0.0
    %953 = vmatprep.subr.mxu0 0.0
    %954 = vmatpush1.msra.mxu0 0.0
    %955 = vmatprep.subr.mxu0 0.0
    %956 = vmatpush1.msra.mxu0 0.0
    %957 = vmatprep.subr.mxu0 0.0
    %958 = vmatpush1.msra.mxu0 0.0
    %959 = vmatprep.subr.mxu0 0.0
    %960 = vmatpush1.msra.mxu0 0.0
    %961 = vmatprep.subr.mxu0 0.0
    %962 = vmatpush1.msra.mxu0 0.0
    %963 = vmatprep.subr.mxu0 0.0
    %964 = vmatpush1.msra.mxu0 0.0
    %965 = vmatprep.subr.mxu0 0.0
    %966 = vmatpush1.msra.mxu0 0.0
    %967 = vmatprep.subr.mxu0 0.0
    %968 = vmatpush1.msra.mxu0 0.0
    %969 = vmatprep.subr.mxu0 0.0
    %970 = vmatpush1.msra.mxu0 0.0
    %971 = vmatprep.subr.mxu0 0.0
    %972 = vmatpush1.msra.mxu0 0.0
    %973 = vmatprep.subr.mxu0 0.0
    %974 = vmatpush1.msra.mxu0 0.0
    %975 = vmatprep.subr.mxu0 0.0
    %976 = vmatpush1.msra.mxu0 0.0
    %977 = vmatprep.subr.mxu0 0.0
    %978 = vmatpush1.msra.mxu0 0.0
    %979 = vmatprep.subr.mxu0 0.0
    %980 = vmatpush1.msra.mxu0 0.0
    %981 = vmatprep.subr.mxu0 0.0
    %982 = vmatpush1.msra.mxu0 0.0
    %983 = vmatprep.subr.mxu0 0.0
    %984 = vmatpush1.msra.mxu0 0.0
    %985 = vmatprep.subr.mxu0 0.0
    %986 = vmatpush1.msra.mxu0 0.0
    %987 = vmatprep.subr.mxu0 0.0
    %988 = vmatpush1.msra.mxu0 0.0
    %989 = vmatprep.subr.mxu0 0.0
    %990 = vmatpush1.msra.mxu0 0.0
    %991 = vmatprep.subr.mxu0 0.0
    %992 = vmatpush1.msra.mxu0 0.0
    %993 = vmatprep.subr.mxu0 0.0
    %994 = vmatpush1.msra.mxu0 0.0
    %995 = vmatprep.mubr.f32.mxu0 0.0
    %996 = vmatmul.mubr.f32.gmra.mrb[0].mxu0 %v535
    %v997 = vpop.f32.mrb[0].mxu0
    %v998 = vadd.f32 0.0, %v997
    %v999 = vpop.f32.mrb[0].mxu0
    %1000 = vdwg.mxu0
    %1001 = vmatprep.subr.mxu0 0.0
    %1002 = vmatpush1.msra.mxu0 %v927
    %1003 = vmatprep.subr.mxu0 0.0
    %1004 = vmatpush1.msra.mxu0 %v928
    %1005 = vmatprep.subr.mxu0 0.0
    %1006 = vmatpush1.msra.mxu0 %v929
    %1007 = vmatprep.subr.mxu0 0.0
    %1008 = vmatpush1.msra.mxu0 %v930
    %1009 = vmatprep.subr.mxu0 0.0
    %1010 = vmatpush1.msra.mxu0 0.0
    %1011 = vmatprep.subr.mxu0 0.0
    %1012 = vmatpush1.msra.mxu0 0.0
    %1013 = vmatprep.subr.mxu0 0.0
    %1014 = vmatpush1.msra.mxu0 0.0
    %1015 = vmatprep.subr.mxu0 0.0
    %1016 = vmatpush1.msra.mxu0 0.0
    %1017 = vmatprep.subr.mxu0 0.0
    %1018 = vmatpush1.msra.mxu0 0.0
    %1019 = vmatprep.subr.mxu0 0.0
    %1020 = vmatpush1.msra.mxu0 0.0
    %1021 = vmatprep.subr.mxu0 0.0
    %1022 = vmatpush1.msra.mxu0 0.0
    %1023 = vmatprep.subr.mxu0 0.0
    %1024 = vmatpush1.msra.mxu0 0.0
    %1025 = vmatprep.subr.mxu0 0.0
    %1026 = vmatpush1.msra.mxu0 0.0
    %1027 = vmatprep.subr.mxu0 0.0
    %1028 = vmatpush1.msra.mxu0 0.0
    %1029 = vmatprep.subr.mxu0 0.0
    %1030 = vmatpush1.msra.mxu0 0.0
    %1031 = vmatprep.subr.mxu0 0.0
    %1032 = vmatpush1.msra.mxu0 0.0
    %1033 = vmatprep.subr.mxu0 0.0
    %1034 = vmatpush1.msra.mxu0 0.0
    %1035 = vmatprep.subr.mxu0 0.0
    %1036 = vmatpush1.msra.mxu0 0.0
    %1037 = vmatprep.subr.mxu0 0.0
    %1038 = vmatpush1.msra.mxu0 0.0
    %1039 = vmatprep.subr.mxu0 0.0
    %1040 = vmatpush1.msra.mxu0 0.0
    %1041 = vmatprep.subr.mxu0 0.0
    %1042 = vmatpush1.msra.mxu0 0.0
    %1043 = vmatprep.subr.mxu0 0.0
    %1044 = vmatpush1.msra.mxu0 0.0
    %1045 = vmatprep.subr.mxu0 0.0
    %1046 = vmatpush1.msra.mxu0 0.0
    %1047 = vmatprep.subr.mxu0 0.0
    %1048 = vmatpush1.msra.mxu0 0.0
    %1049 = vmatprep.subr.mxu0 0.0
    %1050 = vmatpush1.msra.mxu0 0.0
    %1051 = vmatprep.subr.mxu0 0.0
    %1052 = vmatpush1.msra.mxu0 0.0
    %1053 = vmatprep.subr.mxu0 0.0
    %1054 = vmatpush1.msra.mxu0 0.0
    %1055 = vmatprep.subr.mxu0 0.0
    %1056 = vmatpush1.msra.mxu0 0.0
    %1057 = vmatprep.subr.mxu0 0.0
    %1058 = vmatpush1.msra.mxu0 0.0
    %1059 = vmatprep.subr.mxu0 0.0
    %1060 = vmatpush1.msra.mxu0 0.0
    %1061 = vmatprep.subr.mxu0 0.0
    %1062 = vmatpush1.msra.mxu0 0.0
    %1063 = vmatprep.subr.mxu0 0.0
    %1064 = vmatpush1.msra.mxu0 0.0
    %1065 = vmatprep.mubr.f32.mxu0 0.0
    %1066 = vmatmul.mubr.f32.gmra.mrb[0].mxu0 %v240
    %v1067 = vpop.f32.mrb[0].mxu0
    %v1068 = vadd.f32 0.0, %v1067
    %v1069 = vpop.f32.mrb[0].mxu0
    %1070 = vdwg.mxu0
    %v1071 = vlaneseq
    %v1072 = vshrl.u32 %v1071, 7
    %v1073 = vsub.s32 0, %v1072
    %v1074 = vrot.slane %v998, %v1073
    %v1075 = vadd.f32 %v1074, %v1068
    %1076 = vrot.lane.b32.xlu0 %v616, 32
    %v1077 = vpop.permute.xlu0 %1076
    %v1079 = vadd.f32 %v1075, %v1077
    %v1080 = vxor.u32 %v1079, 2147483648
    %v1081 = vmul.f32 %v1080, 1.442695
    %v1082 = vpow.pop %v1081
    %v1083 = vadd.f32 %v1082, 1.0
    %v1084 = vrcp.pop %v1083
    %v1085 = vmul.f32 1.0, %v1084
    %v1086 = vsel %vm238, %v1085, -inf
    %v1087 = vrot.slane %v1086, 4
    %v1088 = vmax.f32 %v1086, %v1087
    %v1089 = vrot.slane %v1088, 2
    %v1090 = vmax.f32 %v1088, %v1089
    %v1091 = vrot.slane %v1090, 1
    %v1092 = vmax.f32 %v1090, %v1091
    %v1093 = vmax.f32 %v1092, %v922
    %v1094 = vlaneseq
    %v1095 = vshrl.u32 %v1094, 7
    %v1096 = vsub.s32 0, %v1095
    %v1097 = vrot.slane %v1093, %v1096
    %v1098 = vsub.f32 %v1085, %v1097
    %v1099 = vmul.f32 %v1098, 1.442695
    %v1100 = vpow.pop %v1099
    %v1101 = vsub.f32 %v922, %v1093
    %v1102 = vmul.f32 %v1101, 1.442695
    %v1103 = vpow.pop %v1102
    %v1104 = vsel %vm238, %v1100, 0.0
    %v1105 = vrot.slane %v1104, 4
    %v1106 = vadd.f32 %v1104, %v1105
    %v1107 = vrot.slane %v1106, 2
    %v1108 = vadd.f32 %v1106, %v1107
    %v1109 = vrot.slane %v1108, 1
    %v1110 = vadd.f32 %v1108, %v1109
    %v1111 = vadd.f32 %v1110, %v1103
    %v1112 = vrcp.pop %v1111
    %v1113 = vmul.f32 1.0, %v1112
    %v1114 = vmul.f32 %v1103, %v1113
    %v1115 = vmul.f32 %v1114, %v51
    %v1116 = vlaneseq
    %v1117 = vshrl.u32 %v1116, 7
    %v1118 = vsub.s32 0, %v1117
    %v1119 = vrot.slane %v1113, %v1118
    %v1120 = vmul.f32 %v1100, %v1119
    %v1121 = vmul.f32 %v1120, %v49
    %v1122 = vsel %vm238, %v1121, 0.0
    %v1123 = vrot.slane %v1122, 4
    %v1124 = vadd.f32 %v1122, %v1123
    %v1125 = vrot.slane %v1124, 2
    %v1126 = vadd.f32 %v1124, %v1125
    %v1127 = vrot.slane %v1126, 1
    %v1128 = vadd.f32 %v1126, %v1127
    %v1129 = vadd.f32 %v1115, %v1128
    %v1130 = vtanh.pop %v1129
    %1132 = vrot.lane.b32.xlu0 %v1130, 32
    %v1133 = vpop.permute.xlu0 %1132
    %v1135 = vmul.f32 %v922, %v1133
    %1137 = vrot.lane.b32.xlu0 %v750, 96
    %v1138 = vpop.permute.xlu0 %1137
    %1140 = vst.msk [vmem:[%s9] sm:$0xff] %vm238, %v1138
    %vm1141 = vcmask 523520
    %1142 = vst.msk [vmem:[%s9] sm:$0xff] %vm1141, %v748
    %1144 = vrot.lane.b32.xlu0 %v1135, 96
    %v1145 = vpop.permute.xlu0 %1144
    %vm1147 = vcmask 253952
    %1148 = vst.msk [vmem:[%s10] sm:$0x1] %vm1147, %v1145
    %1150 = vrot.lane.b32.xlu0 %v1129, 32
    %v1151 = vpop.permute.xlu0 %1150
    %vm1153 = vcmask 516352
    %1154 = vst.msk [vmem:[%s10] sm:$0x1] %vm1153, %v1151
    // Predicated region
    $region42: #{slstm_cell.1} parent=1 // pred_check
      _
    $region43: #{slstm_cell.1} parent=1 // pred_check_branch
      %1156 = sbr.rel (0) target = $region45
    $region44: #{slstm_cell.1} parent=1 // pred_region
      _
    $region45: #{slstm_cell.1} parent=1 // pred_fallthru
      _
    // Predicated region
    $region46: #{slstm_cell.1} parent=1 // pred_check
      _
    $region47: #{slstm_cell.1} parent=1 // pred_check_branch
      %1158 = sbr.rel (0) target = $region49
    $region48: #{slstm_cell.1} parent=1 // pred_region
      _
    $region49: #{slstm_cell.1} parent=1 // pred_fallthru
      _
    // Predicated region
    $region50: #{slstm_cell.1} parent=1 // pred_check
      _
    $region51: #{slstm_cell.1} parent=1 // pred_check_branch
      %1160 = sbr.rel (0) target = $region53
    $region52: #{slstm_cell.1} parent=1 // pred_region
      _
    $region53: #{slstm_cell.1} parent=1 // pred_fallthru
      _
    // Predicated region
    $region54: #{slstm_cell.1} parent=1 // pred_check
      _
    $region55: #{slstm_cell.1} parent=1 // pred_check_branch
      %1162 = sbr.rel (0) target = $region57
    $region56: #{slstm_cell.1} parent=1 // pred_region
      _
    $region57: #{slstm_cell.1} parent=1 // pred_fallthru
      _
    %1163 = vsyncpa [#allocation3], 1

</llo_original>
